<compile_context>
chip_gen: v7x
topology: tpu7x:2x2x1
jax: 0.10.0
libtpu: 0.0.40
codegen_flags: <defaults>
</compile_context>

<pallas_src>
import functools

import jax
import jax.numpy as jnp
from jax.experimental import pallas as pl
from jax.experimental.pallas import tpu as pltpu


# ----------------------------------------------------------------------------
# Pallas kernel: 3x3 conv as 3 accumulated matmuls (one per dy shift),
# + bias + ReLU + global-avg-pool + view-mean, one sample per grid step.
# ----------------------------------------------------------------------------
def _feature_kernel(x_ref, w_ref, b_ref, o_ref, *, n_rows, row_stride, inv_count):
    """
    x_ref: (Hp*V*W, 3*C)  bf16   rows ordered (h_padded, view, w)
    w_ref: (3, 3*C, Cpad) bf16   w_ref[dy][dx*C+c, o] = conv_w[o, c, dy, dx]
    b_ref: (1, Cpad)      f32
    o_ref: (1, 1, Cpad)   f32    per-sample feature row (lane-dense, padded)
    """
    cpad = o_ref.shape[-1]
    conv = jnp.zeros((n_rows, cpad), jnp.float32)
    for dy in range(3):
        # dy shift == one contiguous, sublane-aligned row window of the block.
        win = x_ref[pl.ds(dy * row_stride, n_rows), :]
        conv = conv + jnp.dot(win, w_ref[dy], preferred_element_type=jnp.float32)
    act = jnp.maximum(conv + b_ref[...], 0.0)                     # bias + ReLU
    feat = jnp.sum(act, axis=0, keepdims=True) * inv_count        # GAP + view mean
    o_ref[...] = feat.reshape(o_ref.shape)


# ----------------------------------------------------------------------------
# Wrapper: glue (reshape / NHWC / pad / 3x dx-expansion) + pallas_call + split.
# ----------------------------------------------------------------------------
def meta_template_parse_feature(x_nchw, w, b, *, n_way, n_support, n_query=1):
    """x_nchw: (n_way, n_support+n_query, n_views, C, H, W), float32."""
    nw, nsq, V, C, H, W = x_nchw.shape
    assert nw == n_way and nsq == n_support + n_query
    N = n_way * (n_support + n_query)
    Cout = w.shape[0]
    Cpad = ((Cout + 127) // 128) * 128        # lane-dense feature width
    Hp = H + 2
    K = 3 * C

    # --- glue: x.view(N, ...) ; NCHW -> NHWC ; spatial zero-pad for 3x3/SAME ---
    x = x_nchw.reshape(N, V, C, H, W)
    x = jnp.transpose(x, (0, 1, 3, 4, 2))                         # (N, V, H, W, C)
    xp = jnp.pad(x, ((0, 0), (0, 0), (1, 1), (1, 1), (0, 0)))     # (N, V, Hp, Wp, C)

    # --- glue: 3x dx-expansion only (the dy shifts happen in-kernel) ---
    # xcol[n, v, h', w, dx*C + c] = xp[n, v, h', w + dx, c]
    xcol = jnp.concatenate([xp[:, :, :, dx:dx + W, :] for dx in range(3)], axis=-1)
    # Order rows as (h', v, w) so every dy shift is a single contiguous slice
    # covering all views at once (3 big matmuls per sample instead of 9 small).
    xrow = jnp.transpose(xcol, (0, 2, 1, 3, 4)).reshape(N, Hp * V * W, K)
    xrow = xrow.astype(jnp.bfloat16)

    # PyTorch conv weight (Cout, C, 3, 3) -> (dy, dx*C + c, Cout), Cout padded to 128.
    w3 = jnp.transpose(w, (2, 3, 1, 0)).reshape(3, K, Cout)
    w3 = jnp.pad(w3, ((0, 0), (0, 0), (0, Cpad - Cout))).astype(jnp.bfloat16)
    b_row = jnp.pad(b.astype(jnp.float32), (0, Cpad - Cout)).reshape(1, Cpad)

    kernel = functools.partial(
        _feature_kernel,
        n_rows=H * V * W, row_stride=V * W, inv_count=1.0 / (H * W * V))

    # TODO(synk): at realistic image sizes add an M-tile grid axis over the
    # (Hp*V*W) rows (partial GAP sums in scratch) so blocks fit v7x's 64 MiB VMEM.
    out = pl.pallas_call(
        kernel,
        out_shape=jax.ShapeDtypeStruct((N, 1, Cpad), jnp.float32),
        grid_spec=pltpu.PrefetchScalarGridSpec(
            num_scalar_prefetch=0,
            grid=(N,),                                   # one step per sample
            in_specs=[
                pl.BlockSpec((pl.Squeezed(), Hp * V * W, K), lambda n: (n, 0, 0)),
                pl.BlockSpec((3, K, Cpad), lambda n: (0, 0, 0)),
                pl.BlockSpec((1, Cpad), lambda n: (0, 0)),
            ],
            out_specs=pl.BlockSpec((1, 1, Cpad), lambda n: (n, 0, 0)),
        ),
        compiler_params=pltpu.CompilerParams(
            dimension_semantics=("parallel",)),          # megacore on v7x
    )(xrow, w3, b_row)

    z_all = out[:, 0, :Cout].reshape(n_way, n_support + n_query, Cout)
    z_support = z_all[:, :n_support]
    z_query = z_all[:, n_support:]
    return z_support, z_query


# ----------------------------------------------------------------------------
# Pure-JAX reference (f32 lax.conv) for correctness checking.
# ----------------------------------------------------------------------------
def _reference(x_nchw, w, b, *, n_way, n_support, n_query=1):
    nw, nsq, V, C, H, W = x_nchw.shape
    N = n_way * (n_support + n_query)
    x = x_nchw.reshape(N, V, C, H, W)
    z = jnp.zeros((N, w.shape[0]), jnp.float32)
    for i in range(V):
        conv = jax.lax.conv_general_dilated(
            x[:, i], w, window_strides=(1, 1), padding="SAME",
            dimension_numbers=("NCHW", "OIHW", "NCHW"))
        conv = conv + b.reshape(1, -1, 1, 1)
        act = jnp.maximum(conv, 0.0)
        z = z + jnp.mean(act, axis=(2, 3))
    z_all = (z / V).reshape(n_way, n_support + n_query, -1)
    return z_all[:, :n_support], z_all[:, n_support:]


# TODO(synk): `forward`/`set_forward` are abstract and `correct()` is host-side
# numpy/topk evaluation; they have no kernel equivalent and are not implemented.

if __name__ == "__main__":
    n_way, n_support, n_query = 2, 2, 1
    n_views, C, H, W = 3, 4, 16, 16
    Cout = 32  # feat_dim

    key = jax.random.PRNGKey(0)
    kx, kw, kb = jax.random.split(key, 3)

    # PyTorch-style NCHW episode tensor.
    x = jax.random.normal(
        kx, (n_way, n_support + n_query, n_views, C, H, W), jnp.float32)
    # Deterministic synthetic conv parameters (Cout, C, 3, 3) + bias.
    w = jax.random.normal(kw, (Cout, C, 3, 3), jnp.float32) * (1.0 / (3 * 3 * C) ** 0.5)
    b = jax.random.normal(kb, (Cout,), jnp.float32) * 0.01

    z_support, z_query = jax.jit(
        functools.partial(meta_template_parse_feature,
                          n_way=n_way, n_support=n_support, n_query=n_query)
    )(x, w, b)
    jax.block_until_ready((z_support, z_query))

    rs, rq = _reference(x, w, b, n_way=n_way, n_support=n_support, n_query=n_query)

    assert z_support.shape == (n_way, n_support, Cout)
    assert z_query.shape == (n_way, n_query, Cout)
    # Kernel uses bf16 inputs (f32 accumulation) vs the f32 lax.conv reference.
    assert jnp.allclose(z_support, rs, rtol=2e-2, atol=2e-2)
    assert jnp.allclose(z_query, rq, rtol=2e-2, atol=2e-2)

    print("KERNEL_OK")
</pallas_src>

<mosaic_0001>
module attributes {stable_mosaic.version = 11 : i64} {
  func.func @_feature_kernel(%arg0: i32, %arg1: memref<1x864x12xbf16, #tpu.memory_space<vmem>>, %arg2: memref<3x12x128xbf16, #tpu.memory_space<vmem>>, %arg3: memref<1x128xf32, #tpu.memory_space<vmem>>, %arg4: memref<1x1x128xf32, #tpu.memory_space<vmem>>) attributes {dimension_semantics = [#tpu.dimension_semantics<parallel>], iteration_bounds = array<i64: 6>, scalar_prefetch = 0 : i64, scratch_operands = 0 : i64, tpu.core_type = #tpu.core_type<tc>, window_params = [{transform_indices = @transform_0, window_bounds = array<i64: 1, 864, 12>}, {pipeline_mode = #tpu.pipeline_mode<synchronous>, transform_indices = @transform_1, window_bounds = array<i64: 3, 12, 128>}, {pipeline_mode = #tpu.pipeline_mode<synchronous>, transform_indices = @transform_2, window_bounds = array<i64: 1, 128>}, {transform_indices = @transform_3, window_bounds = array<i64: 1, 1, 128>}]} {
    %cst = arith.constant 0.000000e+00 : f32
    %0 = vector.broadcast %cst : f32 to vector<768x128xf32>
    %c0 = arith.constant 0 : index
    %c0_0 = arith.constant 0 : index
    %c0_1 = arith.constant 0 : index
    %1 = vector.load %arg1[%c0, %c0_0, %c0_1] : memref<1x864x12xbf16, #tpu.memory_space<vmem>>, vector<1x768x12xbf16>
    %2 = vector.shape_cast %1 : vector<1x768x12xbf16> to vector<768x12xbf16>
    %c0_2 = arith.constant 0 : index
    %c0_3 = arith.constant 0 : index
    %c0_4 = arith.constant 0 : index
    %3 = vector.load %arg2[%c0_2, %c0_3, %c0_4] : memref<3x12x128xbf16, #tpu.memory_space<vmem>>, vector<1x12x128xbf16>
    %4 = vector.shape_cast %3 : vector<1x12x128xbf16> to vector<12x128xbf16>
    %cst_5 = arith.constant dense<0.000000e+00> : vector<768x128xf32>
    %5 = tpu.matmul %2, %4, %cst_5 {dimension_numbers = #tpu.dot_dimension_numbers<[1], [0], [0], [1], [0, 0, 1, 1], [], []>} : vector<768x12xbf16>, vector<12x128xbf16>, vector<768x128xf32> -> vector<768x128xf32>
    %6 = arith.addf %0, %5 : vector<768x128xf32>
    %c0_6 = arith.constant 0 : index
    %c48 = arith.constant 48 : index
    %c0_7 = arith.constant 0 : index
    %7 = vector.load %arg1[%c0_6, %c48, %c0_7] : memref<1x864x12xbf16, #tpu.memory_space<vmem>>, vector<1x768x12xbf16>
    %8 = vector.shape_cast %7 : vector<1x768x12xbf16> to vector<768x12xbf16>
    %c1 = arith.constant 1 : index
    %c0_8 = arith.constant 0 : index
    %c0_9 = arith.constant 0 : index
    %9 = vector.load %arg2[%c1, %c0_8, %c0_9] : memref<3x12x128xbf16, #tpu.memory_space<vmem>>, vector<1x12x128xbf16>
    %10 = vector.shape_cast %9 : vector<1x12x128xbf16> to vector<12x128xbf16>
    %cst_10 = arith.constant dense<0.000000e+00> : vector<768x128xf32>
    %11 = tpu.matmul %8, %10, %cst_10 {dimension_numbers = #tpu.dot_dimension_numbers<[1], [0], [0], [1], [0, 0, 1, 1], [], []>} : vector<768x12xbf16>, vector<12x128xbf16>, vector<768x128xf32> -> vector<768x128xf32>
    %12 = arith.addf %6, %11 : vector<768x128xf32>
    %c0_11 = arith.constant 0 : index
    %c96 = arith.constant 96 : index
    %c0_12 = arith.constant 0 : index
    %13 = vector.load %arg1[%c0_11, %c96, %c0_12] : memref<1x864x12xbf16, #tpu.memory_space<vmem>>, vector<1x768x12xbf16>
    %14 = vector.shape_cast %13 : vector<1x768x12xbf16> to vector<768x12xbf16>
    %c2 = arith.constant 2 : index
    %c0_13 = arith.constant 0 : index
    %c0_14 = arith.constant 0 : index
    %15 = vector.load %arg2[%c2, %c0_13, %c0_14] : memref<3x12x128xbf16, #tpu.memory_space<vmem>>, vector<1x12x128xbf16>
    %16 = vector.shape_cast %15 : vector<1x12x128xbf16> to vector<12x128xbf16>
    %cst_15 = arith.constant dense<0.000000e+00> : vector<768x128xf32>
    %17 = tpu.matmul %14, %16, %cst_15 {dimension_numbers = #tpu.dot_dimension_numbers<[1], [0], [0], [1], [0, 0, 1, 1], [], []>} : vector<768x12xbf16>, vector<12x128xbf16>, vector<768x128xf32> -> vector<768x128xf32>
    %18 = arith.addf %12, %17 : vector<768x128xf32>
    %c0_16 = arith.constant 0 : index
    %c0_17 = arith.constant 0 : index
    %19 = vector.load %arg3[%c0_16, %c0_17] : memref<1x128xf32, #tpu.memory_space<vmem>>, vector<1x128xf32>
    %20 = vector.broadcast %19 : vector<1x128xf32> to vector<768x128xf32>
    %21 = arith.addf %18, %20 : vector<768x128xf32>
    %cst_18 = arith.constant 0.000000e+00 : f32
    %22 = vector.broadcast %cst_18 : f32 to vector<768x128xf32>
    %23 = arith.maximumf %21, %22 : vector<768x128xf32>
    %cst_19 = arith.constant dense<0.000000e+00> : vector<128xf32>
    %24 = vector.multi_reduction <add>, %23, %cst_19 [0] : vector<768x128xf32> to vector<128xf32>
    %25 = vector.shape_cast %24 : vector<128xf32> to vector<1x128xf32>
    %cst_20 = arith.constant 0.00130208337 : f32
    %26 = vector.broadcast %cst_20 : f32 to vector<1x128xf32>
    %27 = arith.mulf %25, %26 : vector<1x128xf32>
    %28 = vector.shape_cast %27 : vector<1x128xf32> to vector<1x1x128xf32>
    %c0_21 = arith.constant 0 : index
    %c0_22 = arith.constant 0 : index
    %c0_23 = arith.constant 0 : index
    %29 = vector.load %arg4[%c0_21, %c0_22, %c0_23] : memref<1x1x128xf32, #tpu.memory_space<vmem>>, vector<1x1x128xf32>
    tpu.vector_store %arg4[%c0_21, %c0_22, %c0_23], %28 {strides = array<i32>} : memref<1x1x128xf32, #tpu.memory_space<vmem>>, vector<1x1x128xf32>,
    return
  }
  func.func @transform_0(%arg0: i32) -> (i32, i32, i32) {
    %c0_i32 = arith.constant 0 : i32
    %c0_i32_0 = arith.constant 0 : i32
    %c0_i32_1 = arith.constant 0 : i32
    return %arg0, %c0_i32, %c0_i32_0 : i32, i32, i32
  }
  func.func @transform_1(%arg0: i32) -> (i32, i32, i32) {
    %c0_i32 = arith.constant 0 : i32
    %c0_i32_0 = arith.constant 0 : i32
    %c0_i32_1 = arith.constant 0 : i32
    %c0_i32_2 = arith.constant 0 : i32
    return %c0_i32, %c0_i32_0, %c0_i32_1 : i32, i32, i32
  }
  func.func @transform_2(%arg0: i32) -> (i32, i32) {
    %c0_i32 = arith.constant 0 : i32
    %c0_i32_0 = arith.constant 0 : i32
    %c0_i32_1 = arith.constant 0 : i32
    return %c0_i32, %c0_i32_0 : i32, i32
  }
  func.func @transform_3(%arg0: i32) -> (i32, i32, i32) {
    %c0_i32 = arith.constant 0 : i32
    %c0_i32_0 = arith.constant 0 : i32
    %c0_i32_1 = arith.constant 0 : i32
    return %arg0, %c0_i32, %c0_i32_0 : i32, i32, i32
  }
}

</mosaic_0001>

<llo_original>
// kernel: meta_template_parse_feature.1
$region0: #{meta_template_parse_feature.1}
  #allocation0 [shape = 'u32[]', space=smem, size = 0x4, offset = 0x4, fixed_abs, tag = 'smem constant byte address 0x4 - core index']
  #allocation1 [shape = 'u32[144,128]{1,0:T(1,128)}', space=vmem, size = 0x12000, scoped, tag = 'internal scratch']
  %s0 = inlined_call_operand.vmem [shape: bf16[6,864,12], index: 0, kind: input, shape index: {}]
  %s1 = inlined_call_operand.vmem [shape: bf16[3,12,128], index: 1, kind: input, shape index: {}]
  %s2 = inlined_call_operand.vmem [shape: f32[1,128], index: 2, kind: input, shape index: {}]
  %s3 = inlined_call_operand.vmem [shape: f32[6,1,128], index: 3, kind: output, shape index: {}]
  %s4 = sld [smem:[#allocation0]]
  $region45: #{meta_template_parse_feature.1} parent=0
    _
  %s6 = ssub.s32 1, %s4
  %s7 = scalar_select 0, %s6, %s4
  loop: start=0, step=1, limit=8
  $region2: #{meta_template_parse_feature.1} parent=0 // loop_pre_header
    _
  $region3: #{meta_template_parse_feature.1} parent=0 // loop_header
    %s9 = sphi 0, %s13
    %p10 = scmp.ge.s32.totalorder %s9, 8
    %s19 = sphi 0, %s21
    %s22 = sphi 0, %s19
    %s23 = sphi 0, %s22
    %s39 = sphi 0, %s23
    %s43 = sphi 0, %s43
    %s45 = sphi 0, %s43
    %s46 = sphi 0, %s45
    %s60 = sphi 0, %s46
    %s64 = sphi 0, %s64
    %s66 = sphi 0, %s64
    %s67 = sphi 0, %s66
    %s81 = sphi 0, %s67
    %s87 = sphi 0, %s89
    %s90 = sphi 0, %s87
    %s91 = sphi 0, %s90
    %s107 = sphi 0, %s91
  $region4: #{meta_template_parse_feature.1} parent=0 // loop_header_branch
    %12 = sbr.rel (%p10) target = $region8
  $region5: #{meta_template_parse_feature.1} parent=0 // loop_body
    %s14 = ssub.s32 %s9, 1
    %s15 = ssub.s32 %s9, 2
    %s16 = sadd.s32 %s9, 1
    %s17 = ssub.s32 %s9, %s16
    %p18 = scmp.eq.s32.totalorder %s17, 0
    %s20 = sadd.s32 %s19, 1
    %s21 = scalar_select %p18, %s19, %s20
    %p24 = pneg %p18
    %p25 = scmp.eq.s32.totalorder %s9, 5
    %p26 = por %p24, %p25
    %p27 = scmp.ne.s32.totalorder %s19, %s22
    %p28 = scmp.eq.s32.totalorder %s9, 0
    %p29 = por %p27, %p28
    %p30 = scmp.ne.s32.totalorder %s19, %s22
    %p31 = scmp.eq.s32.totalorder %s14, 5
    %p32 = por %p30, %p31
    %p33 = scmp.ne.s32.totalorder %s22, %s23
    %p34 = scmp.eq.s32.totalorder %s14, 0
    %p35 = por %p33, %p34
    %p36 = scmp.ne.s32.totalorder %s22, %s23
    %p37 = scmp.eq.s32.totalorder %s15, 5
    %p38 = por %p36, %p37
    %p40 = scmp.ne.s32.totalorder %s23, %s39
    %p41 = scmp.eq.s32.totalorder %s15, 0
    %p42 = por %p40, %p41
    %s44 = sadd.s32 %s43, 1
    %p47 = scmp.eq.s32.totalorder %s9, 5
    %p48 = scmp.ne.s32.totalorder %s43, %s45
    %p49 = scmp.eq.s32.totalorder %s9, 0
    %p50 = por %p48, %p49
    %p51 = scmp.ne.s32.totalorder %s43, %s45
    %p52 = scmp.eq.s32.totalorder %s14, 5
    %p53 = por %p51, %p52
    %p54 = scmp.ne.s32.totalorder %s45, %s46
    %p55 = scmp.eq.s32.totalorder %s14, 0
    %p56 = por %p54, %p55
    %p57 = scmp.ne.s32.totalorder %s45, %s46
    %p58 = scmp.eq.s32.totalorder %s15, 5
    %p59 = por %p57, %p58
    %p61 = scmp.ne.s32.totalorder %s46, %s60
    %p62 = scmp.eq.s32.totalorder %s15, 0
    %p63 = por %p61, %p62
    %s65 = sadd.s32 %s64, 1
    %p68 = scmp.eq.s32.totalorder %s9, 5
    %p69 = scmp.ne.s32.totalorder %s64, %s66
    %p70 = scmp.eq.s32.totalorder %s9, 0
    %p71 = por %p69, %p70
    %p72 = scmp.ne.s32.totalorder %s64, %s66
    %p73 = scmp.eq.s32.totalorder %s14, 5
    %p74 = por %p72, %p73
    %p75 = scmp.ne.s32.totalorder %s66, %s67
    %p76 = scmp.eq.s32.totalorder %s14, 0
    %p77 = por %p75, %p76
    %p78 = scmp.ne.s32.totalorder %s66, %s67
    %p79 = scmp.eq.s32.totalorder %s15, 5
    %p80 = por %p78, %p79
    %p82 = scmp.ne.s32.totalorder %s67, %s81
    %p83 = scmp.eq.s32.totalorder %s15, 0
    %p84 = por %p82, %p83
    %s85 = ssub.s32 %s9, %s16
    %p86 = scmp.eq.s32.totalorder %s85, 0
    %s88 = sadd.s32 %s87, 1
    %s89 = scalar_select %p86, %s87, %s88
    %p92 = pneg %p86
    %p93 = scmp.eq.s32.totalorder %s9, 5
    %p94 = por %p92, %p93
    %p95 = scmp.ne.s32.totalorder %s87, %s90
    %p96 = scmp.eq.s32.totalorder %s9, 0
    %p97 = por %p95, %p96
    %p98 = scmp.ne.s32.totalorder %s87, %s90
    %p99 = scmp.eq.s32.totalorder %s14, 5
    %p100 = por %p98, %p99
    %p101 = scmp.ne.s32.totalorder %s90, %s91
    %p102 = scmp.eq.s32.totalorder %s14, 0
    %p103 = por %p101, %p102
    %p104 = scmp.ne.s32.totalorder %s90, %s91
    %p105 = scmp.eq.s32.totalorder %s15, 5
    %p106 = por %p104, %p105
    %p108 = scmp.ne.s32.totalorder %s91, %s107
    %p109 = scmp.eq.s32.totalorder %s15, 0
    %p110 = por %p108, %p109
    %p111 = scmp.le.s32.totalorder 1, %s9
    %p112 = scmp.lt.s32.totalorder %s9, 7
    %p113 = pnand %p111, %p112
    %p114 = pneg %p113
    // Predicated region
    $region9: #{meta_template_parse_feature.1} parent=5 // pred_check
      _
    $region10: #{meta_template_parse_feature.1} parent=5 // pred_check_branch
      %116 = sbr.rel (%p113) target = $region12
    $region11: #{meta_template_parse_feature.1} parent=5 // pred_region
      %s117 = ssub.s32 %s9, 1
      // Predicated region
      $region13: #{meta_template_parse_feature.1} parent=11 // pred_check
        %p118 = pneg %p56
      $region14: #{meta_template_parse_feature.1} parent=11 // pred_check_branch
        %120 = sbr.rel (%p118) target = $region16
      $region15: #{meta_template_parse_feature.1} parent=11 // pred_region
        _
      $region16: #{meta_template_parse_feature.1} parent=11 // pred_fallthru
        _
      // Predicated region
      $region17: #{meta_template_parse_feature.1} parent=11 // pred_check
        %p121 = pneg %p77
      $region18: #{meta_template_parse_feature.1} parent=11 // pred_check_branch
        %123 = sbr.rel (%p121) target = $region20
      $region19: #{meta_template_parse_feature.1} parent=11 // pred_region
        _
      $region20: #{meta_template_parse_feature.1} parent=11 // pred_fallthru
        _
    $region12: #{meta_template_parse_feature.1} parent=5 // pred_fallthru
      _
    %p124 = scmp.lt.s32.totalorder %s9, 6
    // Predicated region
    $region21: #{meta_template_parse_feature.1} parent=5 // pred_check
      %p125 = pneg %p124
    $region22: #{meta_template_parse_feature.1} parent=5 // pred_check_branch
      %127 = sbr.rel (%p125) target = $region24
    $region23: #{meta_template_parse_feature.1} parent=5 // pred_region
      // Predicated region
      $region25: #{meta_template_parse_feature.1} parent=23 // pred_check
        %p128 = pneg %p29
      $region26: #{meta_template_parse_feature.1} parent=23 // pred_check_branch
        %130 = sbr.rel (%p128) target = $region28
      $region27: #{meta_template_parse_feature.1} parent=23 // pred_region
        %p131 = scmp.lt.s32.totalorder %s9, 5
        %s132 = scalar_select %p131, %s9, 5
        %s133 = smul.addr %s132, 108
        %s134 = smul.addr %s133, 4
        %s135 = scalar_lea.vmem %s0, %s134
      $region28: #{meta_template_parse_feature.1} parent=23 // pred_fallthru
        _
    $region24: #{meta_template_parse_feature.1} parent=5 // pred_fallthru
      _
    %p136 = scmp.le.s32.totalorder 1, %s9
    %p137 = scmp.lt.s32.totalorder %s9, 7
    %p138 = pnand %p136, %p137
    %p139 = pneg %p138
    // Predicated region
    $region29: #{meta_template_parse_feature.1} parent=5 // pred_check
      _
    $region30: #{meta_template_parse_feature.1} parent=5 // pred_check_branch
      %141 = sbr.rel (%p138) target = $region32
    $region31: #{meta_template_parse_feature.1} parent=5 // pred_region
      %s142 = ssub.s32 %s9, 1
      %p143 = scmp.lt.s32.totalorder %s14, 5
      %s144 = scalar_select %p143, %s14, 5
      %s145 = smul.addr %s144, 108
      %s146 = smul.addr %s145, 4
      %s147 = scalar_lea.vmem %s0, %s146
      %p148 = pneg %p35
      %p149 = pneg %p32
      %p150 = pneg %p56
      %p151 = pneg %p53
      %p152 = pneg %p77
      %p153 = pneg %p74
      %p154 = pneg %p103
      %p155 = pneg %p100
      %p156 = scmp.lt.s32.totalorder %s14, 5
      %s157 = scalar_select %p156, %s14, 5
      %s158 = scalar_lea.vmem %s3, %s157
      %p159 = scmp.lt.s32.totalorder %s14, 5
      %s160 = scalar_select %p159, %s14, 5
      %s161 = smul.addr %s160, 108
      %s162 = smul.addr %s161, 4
      %s163 = scalar_lea.vmem %s0, %s162
      %p164 = scmp.lt.s32.totalorder %s14, 5
      %s165 = scalar_select %p164, %s14, 5
      %s166 = scalar_lea.vmem %s3, %s165
      %v168 = vld [vmem:[%s163] sm:$0xf]
      %v169 = vld [vmem:[%s163 + $0x4] sm:$0xf]
      %v170 = vld [vmem:[%s163 + $0x8] sm:$0xf]
      %v171 = vld [vmem:[%s163 + $0xc] sm:$0xf]
      %v172 = vld [vmem:[%s163 + $0x10] sm:$0xf]
      %v173 = vld [vmem:[%s163 + $0x14] sm:$0xf]
      %v174 = vld [vmem:[%s163 + $0x18] sm:$0xf]
      %v175 = vld [vmem:[%s163 + $0x1c] sm:$0xf]
      %v176 = vld [vmem:[%s163 + $0x20] sm:$0xf]
      %v177 = vld [vmem:[%s163 + $0x24] sm:$0xf]
      %v178 = vld [vmem:[%s163 + $0x28] sm:$0xf]
      %v179 = vld [vmem:[%s163 + $0x2c] sm:$0xf]
      %v180 = vld [vmem:[%s163 + $0x30] sm:$0xf]
      %v181 = vld [vmem:[%s163 + $0x34] sm:$0xf]
      %v182 = vld [vmem:[%s163 + $0x38] sm:$0xf]
      %v183 = vld [vmem:[%s163 + $0x3c] sm:$0xf]
      %v184 = vld [vmem:[%s163 + $0x40] sm:$0xf]
      %v185 = vld [vmem:[%s163 + $0x44] sm:$0xf]
      %v186 = vld [vmem:[%s163 + $0x48] sm:$0xf]
      %v187 = vld [vmem:[%s163 + $0x4c] sm:$0xf]
      %v188 = vld [vmem:[%s163 + $0x50] sm:$0xf]
      %v189 = vld [vmem:[%s163 + $0x54] sm:$0xf]
      %v190 = vld [vmem:[%s163 + $0x58] sm:$0xf]
      %v191 = vld [vmem:[%s163 + $0x5c] sm:$0xf]
      %v192 = vld [vmem:[%s163 + $0x60] sm:$0xf]
      %v193 = vld [vmem:[%s163 + $0x64] sm:$0xf]
      %v194 = vld [vmem:[%s163 + $0x68] sm:$0xf]
      %v195 = vld [vmem:[%s163 + $0x6c] sm:$0xf]
      %v196 = vld [vmem:[%s163 + $0x70] sm:$0xf]
      %v197 = vld [vmem:[%s163 + $0x74] sm:$0xf]
      %v198 = vld [vmem:[%s163 + $0x78] sm:$0xf]
      %v199 = vld [vmem:[%s163 + $0x7c] sm:$0xf]
      %v200 = vld [vmem:[%s163 + $0x80] sm:$0xf]
      %v201 = vld [vmem:[%s163 + $0x84] sm:$0xf]
      %v202 = vld [vmem:[%s163 + $0x88] sm:$0xf]
      %v203 = vld [vmem:[%s163 + $0x8c] sm:$0xf]
      %v204 = vld [vmem:[%s163 + $0x90] sm:$0xf]
      %v205 = vld [vmem:[%s163 + $0x94] sm:$0xf]
      %v206 = vld [vmem:[%s163 + $0x98] sm:$0xf]
      %v207 = vld [vmem:[%s163 + $0x9c] sm:$0xf]
      %v208 = vld [vmem:[%s163 + $0xa0] sm:$0xf]
      %v209 = vld [vmem:[%s163 + $0xa4] sm:$0xf]
      %v210 = vld [vmem:[%s163 + $0xa8] sm:$0xf]
      %v211 = vld [vmem:[%s163 + $0xac] sm:$0xf]
      %v212 = vld [vmem:[%s163 + $0xb0] sm:$0xf]
      %v213 = vld [vmem:[%s163 + $0xb4] sm:$0xf]
      %v214 = vld [vmem:[%s163 + $0xb8] sm:$0xf]
      %v215 = vld [vmem:[%s163 + $0xbc] sm:$0xf]
      %v216 = vld [vmem:[%s163 + $0xc0] sm:$0xf]
      %v217 = vld [vmem:[%s163 + $0xc4] sm:$0xf]
      %v218 = vld [vmem:[%s163 + $0xc8] sm:$0xf]
      %v219 = vld [vmem:[%s163 + $0xcc] sm:$0xf]
      %v220 = vld [vmem:[%s163 + $0xd0] sm:$0xf]
      %v221 = vld [vmem:[%s163 + $0xd4] sm:$0xf]
      %v222 = vld [vmem:[%s163 + $0xd8] sm:$0xf]
      %v223 = vld [vmem:[%s163 + $0xdc] sm:$0xf]
      %v224 = vld [vmem:[%s163 + $0xe0] sm:$0xf]
      %v225 = vld [vmem:[%s163 + $0xe4] sm:$0xf]
      %v226 = vld [vmem:[%s163 + $0xe8] sm:$0xf]
      %v227 = vld [vmem:[%s163 + $0xec] sm:$0xf]
      %v228 = vld [vmem:[%s163 + $0xf0] sm:$0xf]
      %v229 = vld [vmem:[%s163 + $0xf4] sm:$0xf]
      %v230 = vld [vmem:[%s163 + $0xf8] sm:$0xf]
      %v231 = vld [vmem:[%s163 + $0xfc] sm:$0xf]
      %v232 = vld [vmem:[%s163 + $0x100] sm:$0xf]
      %v233 = vld [vmem:[%s163 + $0x104] sm:$0xf]
      %v234 = vld [vmem:[%s163 + $0x108] sm:$0xf]
      %v235 = vld [vmem:[%s163 + $0x10c] sm:$0xf]
      %v236 = vld [vmem:[%s163 + $0x110] sm:$0xf]
      %v237 = vld [vmem:[%s163 + $0x114] sm:$0xf]
      %v238 = vld [vmem:[%s163 + $0x118] sm:$0xf]
      %v239 = vld [vmem:[%s163 + $0x11c] sm:$0xf]
      %v240 = vld [vmem:[%s163 + $0x120] sm:$0xf]
      %v241 = vld [vmem:[%s163 + $0x124] sm:$0xf]
      %v242 = vld [vmem:[%s163 + $0x128] sm:$0xf]
      %v243 = vld [vmem:[%s163 + $0x12c] sm:$0xf]
      %v244 = vld [vmem:[%s163 + $0x130] sm:$0xf]
      %v245 = vld [vmem:[%s163 + $0x134] sm:$0xf]
      %v246 = vld [vmem:[%s163 + $0x138] sm:$0xf]
      %v247 = vld [vmem:[%s163 + $0x13c] sm:$0xf]
      %v248 = vld [vmem:[%s163 + $0x140] sm:$0xf]
      %v249 = vld [vmem:[%s163 + $0x144] sm:$0xf]
      %v250 = vld [vmem:[%s163 + $0x148] sm:$0xf]
      %v251 = vld [vmem:[%s163 + $0x14c] sm:$0xf]
      %v252 = vld [vmem:[%s163 + $0x150] sm:$0xf]
      %v253 = vld [vmem:[%s163 + $0x154] sm:$0xf]
      %v254 = vld [vmem:[%s163 + $0x158] sm:$0xf]
      %v255 = vld [vmem:[%s163 + $0x15c] sm:$0xf]
      %v256 = vld [vmem:[%s163 + $0x160] sm:$0xf]
      %v257 = vld [vmem:[%s163 + $0x164] sm:$0xf]
      %v258 = vld [vmem:[%s163 + $0x168] sm:$0xf]
      %v259 = vld [vmem:[%s163 + $0x16c] sm:$0xf]
      %v260 = vld [vmem:[%s163 + $0x170] sm:$0xf]
      %v261 = vld [vmem:[%s163 + $0x174] sm:$0xf]
      %v262 = vld [vmem:[%s163 + $0x178] sm:$0xf]
      %v263 = vld [vmem:[%s163 + $0x17c] sm:$0xf]
      %v264 = vld [vmem:[%s1] sm:$0xf]
      %v265 = vld [vmem:[%s1 + $0x4] sm:$0x3]
      %v266 = vld [vmem:[%s163 + $0x180] sm:$0xf]
      %v267 = vld [vmem:[%s163 + $0x184] sm:$0xf]
      %v268 = vld [vmem:[%s163 + $0x188] sm:$0xf]
      %v269 = vld [vmem:[%s163 + $0x18c] sm:$0xf]
      %v270 = vld [vmem:[%s163 + $0x190] sm:$0xf]
      %v271 = vld [vmem:[%s163 + $0x194] sm:$0xf]
      %s272 = scalar_lea.vmem %s1, 8
      %v273 = vld [vmem:[%s272] sm:$0xf]
      %v274 = vld [vmem:[%s272 + $0x4] sm:$0x3]
      %v371 = vunpack.c.l.b16 %v174
      %v372 = vunpack.c.l.b16 %v175
      %v373 = vunpack.c.l.b16 %v176
      %v374 = vunpack.c.l.b16 %v177
      %v375 = vunpack.c.l.b16 %v178
      %v376 = vunpack.c.l.b16 %v179
      %v377 = vunpack.c.l.b16 %v180
      %v378 = vunpack.c.l.b16 %v181
      %v379 = vunpack.c.l.b16 %v182
      %v380 = vunpack.c.l.b16 %v183
      %v381 = vunpack.c.l.b16 %v184
      %v382 = vunpack.c.l.b16 %v185
      %v383 = vunpack.c.l.b16 %v186
      %v384 = vunpack.c.l.b16 %v187
      %v385 = vunpack.c.l.b16 %v188
      %v386 = vunpack.c.l.b16 %v189
      %v387 = vunpack.c.l.b16 %v190
      %v388 = vunpack.c.l.b16 %v191
      %v389 = vunpack.c.l.b16 %v192
      %v390 = vunpack.c.l.b16 %v193
      %v391 = vunpack.c.l.b16 %v194
      %v392 = vunpack.c.l.b16 %v195
      %v393 = vunpack.c.l.b16 %v196
      %v394 = vunpack.c.l.b16 %v197
      %v395 = vunpack.c.l.b16 %v198
      %v396 = vunpack.c.l.b16 %v199
      %v397 = vunpack.c.l.b16 %v200
      %v398 = vunpack.c.l.b16 %v201
      %v399 = vunpack.c.l.b16 %v202
      %v400 = vunpack.c.l.b16 %v203
      %v401 = vunpack.c.l.b16 %v204
      %v402 = vunpack.c.l.b16 %v205
      %v403 = vunpack.c.l.b16 %v206
      %v404 = vunpack.c.l.b16 %v207
      %v405 = vunpack.c.l.b16 %v208
      %v406 = vunpack.c.l.b16 %v209
      %v407 = vunpack.c.l.b16 %v210
      %v408 = vunpack.c.l.b16 %v211
      %v409 = vunpack.c.l.b16 %v212
      %v410 = vunpack.c.l.b16 %v213
      %v411 = vunpack.c.l.b16 %v214
      %v412 = vunpack.c.l.b16 %v215
      %v413 = vunpack.c.l.b16 %v216
      %v414 = vunpack.c.l.b16 %v217
      %v415 = vunpack.c.l.b16 %v218
      %v416 = vunpack.c.l.b16 %v219
      %v417 = vunpack.c.l.b16 %v220
      %v418 = vunpack.c.l.b16 %v221
      %v419 = vunpack.c.l.b16 %v222
      %v420 = vunpack.c.l.b16 %v223
      %v421 = vunpack.c.l.b16 %v224
      %v422 = vunpack.c.l.b16 %v225
      %v423 = vunpack.c.l.b16 %v226
      %v424 = vunpack.c.l.b16 %v227
      %v425 = vunpack.c.l.b16 %v228
      %v426 = vunpack.c.l.b16 %v229
      %v427 = vunpack.c.l.b16 %v230
      %v428 = vunpack.c.l.b16 %v231
      %v429 = vunpack.c.l.b16 %v232
      %v430 = vunpack.c.l.b16 %v233
      %v431 = vunpack.c.l.b16 %v234
      %v432 = vunpack.c.l.b16 %v235
      %v433 = vunpack.c.l.b16 %v236
      %v434 = vunpack.c.l.b16 %v237
      %v435 = vunpack.c.l.b16 %v238
      %v436 = vunpack.c.l.b16 %v239
      %v437 = vunpack.c.l.b16 %v240
      %v438 = vunpack.c.l.b16 %v241
      %v439 = vunpack.c.l.b16 %v242
      %v440 = vunpack.c.l.b16 %v243
      %v441 = vunpack.c.l.b16 %v244
      %v442 = vunpack.c.l.b16 %v245
      %v443 = vunpack.c.l.b16 %v246
      %v444 = vunpack.c.l.b16 %v247
      %v445 = vunpack.c.l.b16 %v248
      %v446 = vunpack.c.l.b16 %v249
      %v447 = vunpack.c.l.b16 %v250
      %v448 = vunpack.c.l.b16 %v251
      %v449 = vunpack.c.l.b16 %v252
      %v450 = vunpack.c.l.b16 %v253
      %v451 = vunpack.c.l.b16 %v254
      %v452 = vunpack.c.l.b16 %v255
      %v453 = vunpack.c.l.b16 %v256
      %v454 = vunpack.c.l.b16 %v257
      %v455 = vunpack.c.l.b16 %v258
      %v456 = vunpack.c.l.b16 %v259
      %v457 = vunpack.c.l.b16 %v260
      %v458 = vunpack.c.l.b16 %v261
      %v459 = vunpack.c.l.b16 %v262
      %v460 = vunpack.c.l.b16 %v263
      %v461 = vunpack.c.l.b16 %v266
      %v462 = vunpack.c.l.b16 %v267
      %v463 = vunpack.c.l.b16 %v268
      %v464 = vunpack.c.l.b16 %v269
      %v465 = vunpack.c.l.b16 %v270
      %v466 = vunpack.c.l.b16 %v271
      %v467 = vpack.c.b16 %v372, %v371
      %v468 = vpack.c.b16 %v374, %v373
      %v469 = vpack.c.b16 %v376, %v375
      %v470 = vpack.c.b16 %v378, %v377
      %v471 = vpack.c.b16 %v380, %v379
      %v472 = vpack.c.b16 %v382, %v381
      %v473 = vpack.c.b16 %v384, %v383
      %v474 = vpack.c.b16 %v386, %v385
      %v475 = vpack.c.b16 %v388, %v387
      %v476 = vpack.c.b16 %v390, %v389
      %v477 = vpack.c.b16 %v392, %v391
      %v478 = vpack.c.b16 %v394, %v393
      %v479 = vpack.c.b16 %v396, %v395
      %v480 = vpack.c.b16 %v398, %v397
      %v481 = vpack.c.b16 %v400, %v399
      %v482 = vpack.c.b16 %v402, %v401
      %v483 = vpack.c.b16 %v404, %v403
      %v484 = vpack.c.b16 %v406, %v405
      %v485 = vpack.c.b16 %v408, %v407
      %v486 = vpack.c.b16 %v410, %v409
      %v487 = vpack.c.b16 %v412, %v411
      %v488 = vpack.c.b16 %v414, %v413
      %v489 = vpack.c.b16 %v416, %v415
      %v490 = vpack.c.b16 %v418, %v417
      %v491 = vpack.c.b16 %v420, %v419
      %v492 = vpack.c.b16 %v422, %v421
      %v493 = vpack.c.b16 %v424, %v423
      %v494 = vpack.c.b16 %v426, %v425
      %v495 = vpack.c.b16 %v428, %v427
      %v496 = vpack.c.b16 %v430, %v429
      %v497 = vpack.c.b16 %v432, %v431
      %v498 = vpack.c.b16 %v434, %v433
      %v499 = vpack.c.b16 %v436, %v435
      %v500 = vpack.c.b16 %v438, %v437
      %v501 = vpack.c.b16 %v440, %v439
      %v502 = vpack.c.b16 %v442, %v441
      %v503 = vpack.c.b16 %v444, %v443
      %v504 = vpack.c.b16 %v446, %v445
      %v505 = vpack.c.b16 %v448, %v447
      %v506 = vpack.c.b16 %v450, %v449
      %v507 = vpack.c.b16 %v452, %v451
      %v508 = vpack.c.b16 %v454, %v453
      %v509 = vpack.c.b16 %v456, %v455
      %v510 = vpack.c.b16 %v458, %v457
      %v511 = vpack.c.b16 %v460, %v459
      %v512 = vpack.c.b16 %v462, %v461
      %v513 = vpack.c.b16 %v464, %v463
      %v514 = vpack.c.b16 %v466, %v465
      %v517 = vunpack.c.l.b16 %v273
      %v518 = vunpack.c.l.b16 %v274
      %v519 = vpack.c.b16 %v518, %v517
      %vm520 = vcmask 97280
      %v522 = vsel %vm520, %v467, 0
      %v525 = vsel %vm520, %v468, 0
      %v528 = vsel %vm520, %v469, 0
      %v531 = vsel %vm520, %v470, 0
      %v534 = vsel %vm520, %v471, 0
      %v537 = vsel %vm520, %v472, 0
      %v540 = vsel %vm520, %v473, 0
      %v543 = vsel %vm520, %v474, 0
      %v546 = vsel %vm520, %v475, 0
      %v549 = vsel %vm520, %v476, 0
      %v552 = vsel %vm520, %v477, 0
      %v555 = vsel %vm520, %v478, 0
      %v558 = vsel %vm520, %v479, 0
      %v561 = vsel %vm520, %v480, 0
      %v564 = vsel %vm520, %v481, 0
      %v567 = vsel %vm520, %v482, 0
      %v570 = vsel %vm520, %v483, 0
      %v573 = vsel %vm520, %v484, 0
      %v576 = vsel %vm520, %v485, 0
      %v579 = vsel %vm520, %v486, 0
      %v582 = vsel %vm520, %v487, 0
      %v585 = vsel %vm520, %v488, 0
      %v588 = vsel %vm520, %v489, 0
      %v591 = vsel %vm520, %v490, 0
      %v594 = vsel %vm520, %v491, 0
      %v597 = vsel %vm520, %v492, 0
      %v600 = vsel %vm520, %v493, 0
      %v603 = vsel %vm520, %v494, 0
      %v606 = vsel %vm520, %v495, 0
      %v609 = vsel %vm520, %v496, 0
      %v612 = vsel %vm520, %v497, 0
      %v615 = vsel %vm520, %v498, 0
      %v618 = vsel %vm520, %v499, 0
      %v621 = vsel %vm520, %v500, 0
      %v624 = vsel %vm520, %v501, 0
      %v627 = vsel %vm520, %v502, 0
      %v630 = vsel %vm520, %v503, 0
      %v633 = vsel %vm520, %v504, 0
      %v636 = vsel %vm520, %v505, 0
      %v639 = vsel %vm520, %v506, 0
      %v642 = vsel %vm520, %v507, 0
      %v645 = vsel %vm520, %v508, 0
      %v648 = vsel %vm520, %v509, 0
      %v651 = vsel %vm520, %v510, 0
      %v654 = vsel %vm520, %v511, 0
      %v657 = vsel %vm520, %v512, 0
      %v660 = vsel %vm520, %v513, 0
      %v663 = vsel %vm520, %v514, 0
      %vm665 = vcmask 1045504
      %v667 = vsel %vm665, %v519, 0
      %669 = vmatprep.subr.bf16.mxu0 0
      %670 = vmatpush1.bf16.msra.mxu0 %v667
      %671 = vmatprep.subr.bf16.mxu0 0
      %672 = vmatpush1.bf16.msra.mxu0 0
      %673 = vmatprep.subr.bf16.mxu0 0
      %674 = vmatpush1.bf16.msra.mxu0 0
      %675 = vmatprep.subr.bf16.mxu0 0
      %676 = vmatpush1.bf16.msra.mxu0 0
      %677 = vmatprep.subr.bf16.mxu0 0
      %678 = vmatpush1.bf16.msra.mxu0 0
      %679 = vmatprep.subr.bf16.mxu0 0
      %680 = vmatpush1.bf16.msra.mxu0 0
      %681 = vmatprep.subr.bf16.mxu0 0
      %682 = vmatpush1.bf16.msra.mxu0 0
      %683 = vmatprep.subr.bf16.mxu0 0
      %684 = vmatpush1.bf16.msra.mxu0 0
      %685 = vmatprep.subr.bf16.mxu0 0
      %686 = vmatpush1.bf16.msra.mxu0 0
      %687 = vmatprep.subr.bf16.mxu0 0
      %688 = vmatpush1.bf16.msra.mxu0 0
      %689 = vmatprep.subr.bf16.mxu0 0
      %690 = vmatpush1.bf16.msra.mxu0 0
      %691 = vmatprep.subr.bf16.mxu0 0
      %692 = vmatpush1.bf16.msra.mxu0 0
      %693 = vmatprep.subr.bf16.mxu0 0
      %694 = vmatpush1.bf16.msra.mxu0 0
      %695 = vmatprep.subr.bf16.mxu0 0
      %696 = vmatpush1.bf16.msra.mxu0 0
      %697 = vmatprep.subr.bf16.mxu0 0
      %698 = vmatpush1.bf16.msra.mxu0 0
      %699 = vmatprep.subr.bf16.mxu0 0
      %700 = vmatpush1.bf16.msra.mxu0 0
      %701 = vmatprep.mubr.bf16.mxu0 0
      %702 = vmatmul.mubr.bf16.gmra.mrb[0].mxu0 %v522
      %v703 = vpop.f32.mrb[0].mxu0
      %v704 = vadd.f32 0.0, %v703
      %v705 = vpop.f32.mrb[0].mxu0
      %v706 = vpop.f32.mrb[0].mxu0
      %v707 = vadd.f32 0.0, %v706
      %v708 = vpop.f32.mrb[0].mxu0
      %709 = vmatprep.mubr.bf16.mxu0 0
      %710 = vmatmul.mubr.bf16.gmra.mrb[0].mxu0 %v525
      %v711 = vpop.f32.mrb[0].mxu0
      %v712 = vadd.f32 0.0, %v711
      %v713 = vpop.f32.mrb[0].mxu0
      %v714 = vpop.f32.mrb[0].mxu0
      %v715 = vadd.f32 0.0, %v714
      %v716 = vpop.f32.mrb[0].mxu0
      %717 = vmatprep.mubr.bf16.mxu0 0
      %718 = vmatmul.mubr.bf16.gmra.mrb[0].mxu0 %v528
      %v719 = vpop.f32.mrb[0].mxu0
      %v720 = vadd.f32 0.0, %v719
      %v721 = vpop.f32.mrb[0].mxu0
      %v722 = vpop.f32.mrb[0].mxu0
      %v723 = vadd.f32 0.0, %v722
      %v724 = vpop.f32.mrb[0].mxu0
      %725 = vmatprep.mubr.bf16.mxu0 0
      %726 = vmatmul.mubr.bf16.gmra.mrb[0].mxu0 %v531
      %v727 = vpop.f32.mrb[0].mxu0
      %v728 = vadd.f32 0.0, %v727
      %v729 = vpop.f32.mrb[0].mxu0
      %v730 = vpop.f32.mrb[0].mxu0
      %v731 = vadd.f32 0.0, %v730
      %v732 = vpop.f32.mrb[0].mxu0
      %733 = vmatprep.mubr.bf16.mxu0 0
      %734 = vmatmul.mubr.bf16.gmra.mrb[0].mxu0 %v534
      %v735 = vpop.f32.mrb[0].mxu0
      %v736 = vadd.f32 0.0, %v735
      %v737 = vpop.f32.mrb[0].mxu0
      %v738 = vpop.f32.mrb[0].mxu0
      %v739 = vadd.f32 0.0, %v738
      %v740 = vpop.f32.mrb[0].mxu0
      %741 = vmatprep.mubr.bf16.mxu0 0
      %742 = vmatmul.mubr.bf16.gmra.mrb[0].mxu0 %v537
      %v743 = vpop.f32.mrb[0].mxu0
      %v744 = vadd.f32 0.0, %v743
      %v745 = vpop.f32.mrb[0].mxu0
      %v746 = vpop.f32.mrb[0].mxu0
      %v747 = vadd.f32 0.0, %v746
      %v748 = vpop.f32.mrb[0].mxu0
      %749 = vmatprep.mubr.bf16.mxu0 0
      %750 = vmatmul.mubr.bf16.gmra.mrb[0].mxu0 %v540
      %v751 = vpop.f32.mrb[0].mxu0
      %v752 = vadd.f32 0.0, %v751
      %v753 = vpop.f32.mrb[0].mxu0
      %v754 = vpop.f32.mrb[0].mxu0
      %v755 = vadd.f32 0.0, %v754
      %v756 = vpop.f32.mrb[0].mxu0
      %757 = vmatprep.mubr.bf16.mxu0 0
      %758 = vmatmul.mubr.bf16.gmra.mrb[0].mxu0 %v543
      %v759 = vpop.f32.mrb[0].mxu0
      %v760 = vadd.f32 0.0, %v759
      %v761 = vpop.f32.mrb[0].mxu0
      %v762 = vpop.f32.mrb[0].mxu0
      %v763 = vadd.f32 0.0, %v762
      %v764 = vpop.f32.mrb[0].mxu0
      %765 = vmatprep.mubr.bf16.mxu0 0
      %766 = vmatmul.mubr.bf16.gmra.mrb[0].mxu0 %v546
      %v767 = vpop.f32.mrb[0].mxu0
      %v768 = vadd.f32 0.0, %v767
      %v769 = vpop.f32.mrb[0].mxu0
      %v770 = vpop.f32.mrb[0].mxu0
      %v771 = vadd.f32 0.0, %v770
      %v772 = vpop.f32.mrb[0].mxu0
      %773 = vmatprep.mubr.bf16.mxu0 0
      %774 = vmatmul.mubr.bf16.gmra.mrb[0].mxu0 %v549
      %v775 = vpop.f32.mrb[0].mxu0
      %v776 = vadd.f32 0.0, %v775
      %v777 = vpop.f32.mrb[0].mxu0
      %v778 = vpop.f32.mrb[0].mxu0
      %v779 = vadd.f32 0.0, %v778
      %v780 = vpop.f32.mrb[0].mxu0
      %781 = vmatprep.mubr.bf16.mxu0 0
      %782 = vmatmul.mubr.bf16.gmra.mrb[0].mxu0 %v552
      %v783 = vpop.f32.mrb[0].mxu0
      %v784 = vadd.f32 0.0, %v783
      %v785 = vpop.f32.mrb[0].mxu0
      %v786 = vpop.f32.mrb[0].mxu0
      %v787 = vadd.f32 0.0, %v786
      %v788 = vpop.f32.mrb[0].mxu0
      %789 = vmatprep.mubr.bf16.mxu0 0
      %790 = vmatmul.mubr.bf16.gmra.mrb[0].mxu0 %v555
      %v791 = vpop.f32.mrb[0].mxu0
      %v792 = vadd.f32 0.0, %v791
      %v793 = vpop.f32.mrb[0].mxu0
      %v794 = vpop.f32.mrb[0].mxu0
      %v795 = vadd.f32 0.0, %v794
      %v796 = vpop.f32.mrb[0].mxu0
      %797 = vmatprep.mubr.bf16.mxu0 0
      %798 = vmatmul.mubr.bf16.gmra.mrb[0].mxu0 %v558
      %v799 = vpop.f32.mrb[0].mxu0
      %v800 = vadd.f32 0.0, %v799
      %v801 = vpop.f32.mrb[0].mxu0
      %v802 = vpop.f32.mrb[0].mxu0
      %v803 = vadd.f32 0.0, %v802
      %v804 = vpop.f32.mrb[0].mxu0
      %805 = vmatprep.mubr.bf16.mxu0 0
      %806 = vmatmul.mubr.bf16.gmra.mrb[0].mxu0 %v561
      %v807 = vpop.f32.mrb[0].mxu0
      %v808 = vadd.f32 0.0, %v807
      %v809 = vpop.f32.mrb[0].mxu0
      %v810 = vpop.f32.mrb[0].mxu0
      %v811 = vadd.f32 0.0, %v810
      %v812 = vpop.f32.mrb[0].mxu0
      %813 = vmatprep.mubr.bf16.mxu0 0
      %814 = vmatmul.mubr.bf16.gmra.mrb[0].mxu0 %v564
      %v815 = vpop.f32.mrb[0].mxu0
      %v816 = vadd.f32 0.0, %v815
      %v817 = vpop.f32.mrb[0].mxu0
      %v818 = vpop.f32.mrb[0].mxu0
      %v819 = vadd.f32 0.0, %v818
      %v820 = vpop.f32.mrb[0].mxu0
      %821 = vmatprep.mubr.bf16.mxu0 0
      %822 = vmatmul.mubr.bf16.gmra.mrb[0].mxu0 %v567
      %v823 = vpop.f32.mrb[0].mxu0
      %v824 = vadd.f32 0.0, %v823
      %v825 = vpop.f32.mrb[0].mxu0
      %v826 = vpop.f32.mrb[0].mxu0
      %v827 = vadd.f32 0.0, %v826
      %v828 = vpop.f32.mrb[0].mxu0
      %829 = vmatprep.mubr.bf16.mxu0 0
      %830 = vmatmul.mubr.bf16.gmra.mrb[0].mxu0 %v570
      %v831 = vpop.f32.mrb[0].mxu0
      %v832 = vadd.f32 0.0, %v831
      %v833 = vpop.f32.mrb[0].mxu0
      %v834 = vpop.f32.mrb[0].mxu0
      %v835 = vadd.f32 0.0, %v834
      %v836 = vpop.f32.mrb[0].mxu0
      %837 = vmatprep.mubr.bf16.mxu0 0
      %838 = vmatmul.mubr.bf16.gmra.mrb[0].mxu0 %v573
      %v839 = vpop.f32.mrb[0].mxu0
      %v840 = vadd.f32 0.0, %v839
      %v841 = vpop.f32.mrb[0].mxu0
      %v842 = vpop.f32.mrb[0].mxu0
      %v843 = vadd.f32 0.0, %v842
      %v844 = vpop.f32.mrb[0].mxu0
      %845 = vmatprep.mubr.bf16.mxu0 0
      %846 = vmatmul.mubr.bf16.gmra.mrb[0].mxu0 %v576
      %v847 = vpop.f32.mrb[0].mxu0
      %v848 = vadd.f32 0.0, %v847
      %v849 = vpop.f32.mrb[0].mxu0
      %v850 = vpop.f32.mrb[0].mxu0
      %v851 = vadd.f32 0.0, %v850
      %v852 = vpop.f32.mrb[0].mxu0
      %853 = vmatprep.mubr.bf16.mxu0 0
      %854 = vmatmul.mubr.bf16.gmra.mrb[0].mxu0 %v579
      %v855 = vpop.f32.mrb[0].mxu0
      %v856 = vadd.f32 0.0, %v855
      %v857 = vpop.f32.mrb[0].mxu0
      %v858 = vpop.f32.mrb[0].mxu0
      %v859 = vadd.f32 0.0, %v858
      %v860 = vpop.f32.mrb[0].mxu0
      %861 = vmatprep.mubr.bf16.mxu0 0
      %862 = vmatmul.mubr.bf16.gmra.mrb[0].mxu0 %v582
      %v863 = vpop.f32.mrb[0].mxu0
      %v864 = vadd.f32 0.0, %v863
      %v865 = vpop.f32.mrb[0].mxu0
      %v866 = vpop.f32.mrb[0].mxu0
      %v867 = vadd.f32 0.0, %v866
      %v868 = vpop.f32.mrb[0].mxu0
      %869 = vmatprep.mubr.bf16.mxu0 0
      %870 = vmatmul.mubr.bf16.gmra.mrb[0].mxu0 %v585
      %v871 = vpop.f32.mrb[0].mxu0
      %v872 = vadd.f32 0.0, %v871
      %v873 = vpop.f32.mrb[0].mxu0
      %v874 = vpop.f32.mrb[0].mxu0
      %v875 = vadd.f32 0.0, %v874
      %v876 = vpop.f32.mrb[0].mxu0
      %877 = vmatprep.mubr.bf16.mxu0 0
      %878 = vmatmul.mubr.bf16.gmra.mrb[0].mxu0 %v588
      %v879 = vpop.f32.mrb[0].mxu0
      %v880 = vadd.f32 0.0, %v879
      %v881 = vpop.f32.mrb[0].mxu0
      %v882 = vpop.f32.mrb[0].mxu0
      %v883 = vadd.f32 0.0, %v882
      %v884 = vpop.f32.mrb[0].mxu0
      %885 = vmatprep.mubr.bf16.mxu0 0
      %886 = vmatmul.mubr.bf16.gmra.mrb[0].mxu0 %v591
      %v887 = vpop.f32.mrb[0].mxu0
      %v888 = vadd.f32 0.0, %v887
      %v889 = vpop.f32.mrb[0].mxu0
      %v890 = vpop.f32.mrb[0].mxu0
      %v891 = vadd.f32 0.0, %v890
      %v892 = vpop.f32.mrb[0].mxu0
      %893 = vmatprep.mubr.bf16.mxu0 0
      %894 = vmatmul.mubr.bf16.gmra.mrb[0].mxu0 %v594
      %v895 = vpop.f32.mrb[0].mxu0
      %v896 = vadd.f32 0.0, %v895
      %v897 = vpop.f32.mrb[0].mxu0
      %v898 = vpop.f32.mrb[0].mxu0
      %v899 = vadd.f32 0.0, %v898
      %v900 = vpop.f32.mrb[0].mxu0
      %901 = vmatprep.mubr.bf16.mxu0 0
      %902 = vmatmul.mubr.bf16.gmra.mrb[0].mxu0 %v597
      %v903 = vpop.f32.mrb[0].mxu0
      %v904 = vadd.f32 0.0, %v903
      %v905 = vpop.f32.mrb[0].mxu0
      %v906 = vpop.f32.mrb[0].mxu0
      %v907 = vadd.f32 0.0, %v906
      %v908 = vpop.f32.mrb[0].mxu0
      %909 = vmatprep.mubr.bf16.mxu0 0
      %910 = vmatmul.mubr.bf16.gmra.mrb[0].mxu0 %v600
      %v911 = vpop.f32.mrb[0].mxu0
      %v912 = vadd.f32 0.0, %v911
      %v913 = vpop.f32.mrb[0].mxu0
      %v914 = vpop.f32.mrb[0].mxu0
      %v915 = vadd.f32 0.0, %v914
      %v916 = vpop.f32.mrb[0].mxu0
      %917 = vmatprep.mubr.bf16.mxu0 0
      %918 = vmatmul.mubr.bf16.gmra.mrb[0].mxu0 %v603
      %v919 = vpop.f32.mrb[0].mxu0
      %v920 = vadd.f32 0.0, %v919
      %v921 = vpop.f32.mrb[0].mxu0
      %v922 = vpop.f32.mrb[0].mxu0
      %v923 = vadd.f32 0.0, %v922
      %v924 = vpop.f32.mrb[0].mxu0
      %925 = vmatprep.mubr.bf16.mxu0 0
      %926 = vmatmul.mubr.bf16.gmra.mrb[0].mxu0 %v606
      %v927 = vpop.f32.mrb[0].mxu0
      %v928 = vadd.f32 0.0, %v927
      %v929 = vpop.f32.mrb[0].mxu0
      %v930 = vpop.f32.mrb[0].mxu0
      %v931 = vadd.f32 0.0, %v930
      %v932 = vpop.f32.mrb[0].mxu0
      %933 = vmatprep.mubr.bf16.mxu0 0
      %934 = vmatmul.mubr.bf16.gmra.mrb[0].mxu0 %v609
      %v935 = vpop.f32.mrb[0].mxu0
      %v936 = vadd.f32 0.0, %v935
      %v937 = vpop.f32.mrb[0].mxu0
      %v938 = vpop.f32.mrb[0].mxu0
      %v939 = vadd.f32 0.0, %v938
      %v940 = vpop.f32.mrb[0].mxu0
      %941 = vmatprep.mubr.bf16.mxu0 0
      %942 = vmatmul.mubr.bf16.gmra.mrb[0].mxu0 %v612
      %v943 = vpop.f32.mrb[0].mxu0
      %v944 = vadd.f32 0.0, %v943
      %v945 = vpop.f32.mrb[0].mxu0
      %v946 = vpop.f32.mrb[0].mxu0
      %v947 = vadd.f32 0.0, %v946
      %v948 = vpop.f32.mrb[0].mxu0
      %949 = vmatprep.mubr.bf16.mxu0 0
      %950 = vmatmul.mubr.bf16.gmra.mrb[0].mxu0 %v615
      %v951 = vpop.f32.mrb[0].mxu0
      %v952 = vadd.f32 0.0, %v951
      %v953 = vpop.f32.mrb[0].mxu0
      %v954 = vpop.f32.mrb[0].mxu0
      %v955 = vadd.f32 0.0, %v954
      %v956 = vpop.f32.mrb[0].mxu0
      %957 = vmatprep.mubr.bf16.mxu0 0
      %958 = vmatmul.mubr.bf16.gmra.mrb[0].mxu0 %v618
      %v959 = vpop.f32.mrb[0].mxu0
      %v960 = vadd.f32 0.0, %v959
      %v961 = vpop.f32.mrb[0].mxu0
      %v962 = vpop.f32.mrb[0].mxu0
      %v963 = vadd.f32 0.0, %v962
      %v964 = vpop.f32.mrb[0].mxu0
      %965 = vmatprep.mubr.bf16.mxu0 0
      %966 = vmatmul.mubr.bf16.gmra.mrb[0].mxu0 %v621
      %v967 = vpop.f32.mrb[0].mxu0
      %v968 = vadd.f32 0.0, %v967
      %v969 = vpop.f32.mrb[0].mxu0
      %v970 = vpop.f32.mrb[0].mxu0
      %v971 = vadd.f32 0.0, %v970
      %v972 = vpop.f32.mrb[0].mxu0
      %973 = vmatprep.mubr.bf16.mxu0 0
      %974 = vmatmul.mubr.bf16.gmra.mrb[0].mxu0 %v624
      %v975 = vpop.f32.mrb[0].mxu0
      %v976 = vadd.f32 0.0, %v975
      %v977 = vpop.f32.mrb[0].mxu0
      %v978 = vpop.f32.mrb[0].mxu0
      %v979 = vadd.f32 0.0, %v978
      %v980 = vpop.f32.mrb[0].mxu0
      %981 = vmatprep.mubr.bf16.mxu0 0
      %982 = vmatmul.mubr.bf16.gmra.mrb[0].mxu0 %v627
      %v983 = vpop.f32.mrb[0].mxu0
      %v984 = vadd.f32 0.0, %v983
      %v985 = vpop.f32.mrb[0].mxu0
      %v986 = vpop.f32.mrb[0].mxu0
      %v987 = vadd.f32 0.0, %v986
      %v988 = vpop.f32.mrb[0].mxu0
      %989 = vmatprep.mubr.bf16.mxu0 0
      %990 = vmatmul.mubr.bf16.gmra.mrb[0].mxu0 %v630
      %v991 = vpop.f32.mrb[0].mxu0
      %v992 = vadd.f32 0.0, %v991
      %v993 = vpop.f32.mrb[0].mxu0
      %v994 = vpop.f32.mrb[0].mxu0
      %v995 = vadd.f32 0.0, %v994
      %v996 = vpop.f32.mrb[0].mxu0
      %997 = vmatprep.mubr.bf16.mxu0 0
      %998 = vmatmul.mubr.bf16.gmra.mrb[0].mxu0 %v633
      %v999 = vpop.f32.mrb[0].mxu0
      %v1000 = vadd.f32 0.0, %v999
      %v1001 = vpop.f32.mrb[0].mxu0
      %v1002 = vpop.f32.mrb[0].mxu0
      %v1003 = vadd.f32 0.0, %v1002
      %v1004 = vpop.f32.mrb[0].mxu0
      %1005 = vmatprep.mubr.bf16.mxu0 0
      %1006 = vmatmul.mubr.bf16.gmra.mrb[0].mxu0 %v636
      %v1007 = vpop.f32.mrb[0].mxu0
      %v1008 = vadd.f32 0.0, %v1007
      %v1009 = vpop.f32.mrb[0].mxu0
      %v1010 = vpop.f32.mrb[0].mxu0
      %v1011 = vadd.f32 0.0, %v1010
      %v1012 = vpop.f32.mrb[0].mxu0
      %1013 = vmatprep.mubr.bf16.mxu0 0
      %1014 = vmatmul.mubr.bf16.gmra.mrb[0].mxu0 %v639
      %v1015 = vpop.f32.mrb[0].mxu0
      %v1016 = vadd.f32 0.0, %v1015
      %v1017 = vpop.f32.mrb[0].mxu0
      %v1018 = vpop.f32.mrb[0].mxu0
      %v1019 = vadd.f32 0.0, %v1018
      %v1020 = vpop.f32.mrb[0].mxu0
      %1021 = vmatprep.mubr.bf16.mxu0 0
      %1022 = vmatmul.mubr.bf16.gmra.mrb[0].mxu0 %v642
      %v1023 = vpop.f32.mrb[0].mxu0
      %v1024 = vadd.f32 0.0, %v1023
      %v1025 = vpop.f32.mrb[0].mxu0
      %v1026 = vpop.f32.mrb[0].mxu0
      %v1027 = vadd.f32 0.0, %v1026
      %v1028 = vpop.f32.mrb[0].mxu0
      %1029 = vmatprep.mubr.bf16.mxu0 0
      %1030 = vmatmul.mubr.bf16.gmra.mrb[0].mxu0 %v645
      %v1031 = vpop.f32.mrb[0].mxu0
      %v1032 = vadd.f32 0.0, %v1031
      %v1033 = vpop.f32.mrb[0].mxu0
      %v1034 = vpop.f32.mrb[0].mxu0
      %v1035 = vadd.f32 0.0, %v1034
      %v1036 = vpop.f32.mrb[0].mxu0
      %1037 = vmatprep.mubr.bf16.mxu0 0
      %1038 = vmatmul.mubr.bf16.gmra.mrb[0].mxu0 %v648
      %v1039 = vpop.f32.mrb[0].mxu0
      %v1040 = vadd.f32 0.0, %v1039
      %v1041 = vpop.f32.mrb[0].mxu0
      %v1042 = vpop.f32.mrb[0].mxu0
      %v1043 = vadd.f32 0.0, %v1042
      %v1044 = vpop.f32.mrb[0].mxu0
      %1045 = vmatprep.mubr.bf16.mxu0 0
      %1046 = vmatmul.mubr.bf16.gmra.mrb[0].mxu0 %v651
      %v1047 = vpop.f32.mrb[0].mxu0
      %v1048 = vadd.f32 0.0, %v1047
      %v1049 = vpop.f32.mrb[0].mxu0
      %v1050 = vpop.f32.mrb[0].mxu0
      %v1051 = vadd.f32 0.0, %v1050
      %v1052 = vpop.f32.mrb[0].mxu0
      %1053 = vmatprep.mubr.bf16.mxu0 0
      %1054 = vmatmul.mubr.bf16.gmra.mrb[0].mxu0 %v654
      %v1055 = vpop.f32.mrb[0].mxu0
      %v1056 = vadd.f32 0.0, %v1055
      %v1057 = vpop.f32.mrb[0].mxu0
      %v1058 = vpop.f32.mrb[0].mxu0
      %v1059 = vadd.f32 0.0, %v1058
      %v1060 = vpop.f32.mrb[0].mxu0
      %1061 = vmatprep.mubr.bf16.mxu0 0
      %1062 = vmatmul.mubr.bf16.gmra.mrb[0].mxu0 %v657
      %v1063 = vpop.f32.mrb[0].mxu0
      %v1064 = vadd.f32 0.0, %v1063
      %v1065 = vpop.f32.mrb[0].mxu0
      %v1066 = vpop.f32.mrb[0].mxu0
      %v1067 = vadd.f32 0.0, %v1066
      %v1068 = vpop.f32.mrb[0].mxu0
      %1069 = vmatprep.mubr.bf16.mxu0 0
      %1070 = vmatmul.mubr.bf16.gmra.mrb[0].mxu0 %v660
      %v1071 = vpop.f32.mrb[0].mxu0
      %v1072 = vadd.f32 0.0, %v1071
      %v1073 = vpop.f32.mrb[0].mxu0
      %v1074 = vpop.f32.mrb[0].mxu0
      %v1075 = vadd.f32 0.0, %v1074
      %v1076 = vpop.f32.mrb[0].mxu0
      %1077 = vmatprep.mubr.bf16.mxu0 0
      %1078 = vmatmul.mubr.bf16.gmra.mrb[0].mxu0 %v663
      %v1079 = vpop.f32.mrb[0].mxu0
      %v1080 = vadd.f32 0.0, %v1079
      %v1081 = vpop.f32.mrb[0].mxu0
      %v1082 = vpop.f32.mrb[0].mxu0
      %v1083 = vadd.f32 0.0, %v1082
      %v1084 = vpop.f32.mrb[0].mxu0
      %1085 = vdwg.mxu0
      %v1092 = vunpack.c.l.b16 %v168
      %v1093 = vunpack.c.l.b16 %v169
      %v1094 = vunpack.c.l.b16 %v170
      %v1095 = vunpack.c.l.b16 %v171
      %v1096 = vunpack.c.l.b16 %v172
      %v1097 = vunpack.c.l.b16 %v173
      %v1098 = vpack.c.b16 %v1093, %v1092
      %v1099 = vpack.c.b16 %v1095, %v1094
      %v1100 = vpack.c.b16 %v1097, %v1096
      %v1103 = vunpack.c.l.b16 %v264
      %v1104 = vunpack.c.l.b16 %v265
      %v1105 = vpack.c.b16 %v1104, %v1103
      %v1107 = vsel %vm520, %v1098, 0
      %v1110 = vsel %vm520, %v1099, 0
      %v1113 = vsel %vm520, %v1100, 0
      %v1116 = vsel %vm665, %v1105, 0
      %1118 = vmatprep.subr.bf16.mxu0 0
      %1119 = vmatpush1.bf16.msra.mxu0 %v1116
      %1120 = vmatprep.subr.bf16.mxu0 0
      %1121 = vmatpush1.bf16.msra.mxu0 0
      %1122 = vmatprep.subr.bf16.mxu0 0
      %1123 = vmatpush1.bf16.msra.mxu0 0
      %1124 = vmatprep.subr.bf16.mxu0 0
      %1125 = vmatpush1.bf16.msra.mxu0 0
      %1126 = vmatprep.subr.bf16.mxu0 0
      %1127 = vmatpush1.bf16.msra.mxu0 0
      %1128 = vmatprep.subr.bf16.mxu0 0
      %1129 = vmatpush1.bf16.msra.mxu0 0
      %1130 = vmatprep.subr.bf16.mxu0 0
      %1131 = vmatpush1.bf16.msra.mxu0 0
      %1132 = vmatprep.subr.bf16.mxu0 0
      %1133 = vmatpush1.bf16.msra.mxu0 0
      %1134 = vmatprep.subr.bf16.mxu0 0
      %1135 = vmatpush1.bf16.msra.mxu0 0
      %1136 = vmatprep.subr.bf16.mxu0 0
      %1137 = vmatpush1.bf16.msra.mxu0 0
      %1138 = vmatprep.subr.bf16.mxu0 0
      %1139 = vmatpush1.bf16.msra.mxu0 0
      %1140 = vmatprep.subr.bf16.mxu0 0
      %1141 = vmatpush1.bf16.msra.mxu0 0
      %1142 = vmatprep.subr.bf16.mxu0 0
      %1143 = vmatpush1.bf16.msra.mxu0 0
      %1144 = vmatprep.subr.bf16.mxu0 0
      %1145 = vmatpush1.bf16.msra.mxu0 0
      %1146 = vmatprep.subr.bf16.mxu0 0
      %1147 = vmatpush1.bf16.msra.mxu0 0
      %1148 = vmatprep.subr.bf16.mxu0 0
      %1149 = vmatpush1.bf16.msra.mxu0 0
      %1150 = vmatprep.mubr.bf16.mxu0 0
      %1151 = vmatmul.mubr.bf16.gmra.mrb[0].mxu0 %v1107
      %v1152 = vpop.f32.mrb[0].mxu0
      %v1153 = vadd.f32 %v704, %v1152
      %v1154 = vpop.f32.mrb[0].mxu0
      %v1155 = vpop.f32.mrb[0].mxu0
      %v1156 = vadd.f32 %v707, %v1155
      %v1157 = vpop.f32.mrb[0].mxu0
      %1158 = vmatprep.mubr.bf16.mxu0 0
      %1159 = vmatmul.mubr.bf16.gmra.mrb[0].mxu0 %v1110
      %v1160 = vpop.f32.mrb[0].mxu0
      %v1161 = vadd.f32 %v712, %v1160
      %v1162 = vpop.f32.mrb[0].mxu0
      %v1163 = vpop.f32.mrb[0].mxu0
      %v1164 = vadd.f32 %v715, %v1163
      %v1165 = vpop.f32.mrb[0].mxu0
      %1166 = vmatprep.mubr.bf16.mxu0 0
      %1167 = vmatmul.mubr.bf16.gmra.mrb[0].mxu0 %v1113
      %v1168 = vpop.f32.mrb[0].mxu0
      %v1169 = vadd.f32 %v720, %v1168
      %v1170 = vpop.f32.mrb[0].mxu0
      %v1171 = vpop.f32.mrb[0].mxu0
      %v1172 = vadd.f32 %v723, %v1171
      %v1173 = vpop.f32.mrb[0].mxu0
      %1174 = vmatprep.mubr.bf16.mxu0 0
      %1175 = vmatmul.mubr.bf16.gmra.mrb[0].mxu0 %v522
      %v1176 = vpop.f32.mrb[0].mxu0
      %v1177 = vadd.f32 %v728, %v1176
      %v1178 = vpop.f32.mrb[0].mxu0
      %v1179 = vpop.f32.mrb[0].mxu0
      %v1180 = vadd.f32 %v731, %v1179
      %v1181 = vpop.f32.mrb[0].mxu0
      %1182 = vmatprep.mubr.bf16.mxu0 0
      %1183 = vmatmul.mubr.bf16.gmra.mrb[0].mxu0 %v525
      %v1184 = vpop.f32.mrb[0].mxu0
      %v1185 = vadd.f32 %v736, %v1184
      %v1186 = vpop.f32.mrb[0].mxu0
      %v1187 = vpop.f32.mrb[0].mxu0
      %v1188 = vadd.f32 %v739, %v1187
      %v1189 = vpop.f32.mrb[0].mxu0
      %1190 = vmatprep.mubr.bf16.mxu0 0
      %1191 = vmatmul.mubr.bf16.gmra.mrb[0].mxu0 %v528
      %v1192 = vpop.f32.mrb[0].mxu0
      %v1193 = vadd.f32 %v744, %v1192
      %v1194 = vpop.f32.mrb[0].mxu0
      %v1195 = vpop.f32.mrb[0].mxu0
      %v1196 = vadd.f32 %v747, %v1195
      %v1197 = vpop.f32.mrb[0].mxu0
      %1198 = vmatprep.mubr.bf16.mxu0 0
      %1199 = vmatmul.mubr.bf16.gmra.mrb[0].mxu0 %v531
      %v1200 = vpop.f32.mrb[0].mxu0
      %v1201 = vadd.f32 %v752, %v1200
      %v1202 = vpop.f32.mrb[0].mxu0
      %v1203 = vpop.f32.mrb[0].mxu0
      %v1204 = vadd.f32 %v755, %v1203
      %v1205 = vpop.f32.mrb[0].mxu0
      %1206 = vmatprep.mubr.bf16.mxu0 0
      %1207 = vmatmul.mubr.bf16.gmra.mrb[0].mxu0 %v534
      %v1208 = vpop.f32.mrb[0].mxu0
      %v1209 = vadd.f32 %v760, %v1208
      %v1210 = vpop.f32.mrb[0].mxu0
      %v1211 = vpop.f32.mrb[0].mxu0
      %v1212 = vadd.f32 %v763, %v1211
      %v1213 = vpop.f32.mrb[0].mxu0
      %1214 = vmatprep.mubr.bf16.mxu0 0
      %1215 = vmatmul.mubr.bf16.gmra.mrb[0].mxu0 %v537
      %v1216 = vpop.f32.mrb[0].mxu0
      %v1217 = vadd.f32 %v768, %v1216
      %v1218 = vpop.f32.mrb[0].mxu0
      %v1219 = vpop.f32.mrb[0].mxu0
      %v1220 = vadd.f32 %v771, %v1219
      %v1221 = vpop.f32.mrb[0].mxu0
      %1222 = vmatprep.mubr.bf16.mxu0 0
      %1223 = vmatmul.mubr.bf16.gmra.mrb[0].mxu0 %v540
      %v1224 = vpop.f32.mrb[0].mxu0
      %v1225 = vadd.f32 %v776, %v1224
      %v1226 = vpop.f32.mrb[0].mxu0
      %v1227 = vpop.f32.mrb[0].mxu0
      %v1228 = vadd.f32 %v779, %v1227
      %v1229 = vpop.f32.mrb[0].mxu0
      %1230 = vmatprep.mubr.bf16.mxu0 0
      %1231 = vmatmul.mubr.bf16.gmra.mrb[0].mxu0 %v543
      %v1232 = vpop.f32.mrb[0].mxu0
      %v1233 = vadd.f32 %v784, %v1232
      %v1234 = vpop.f32.mrb[0].mxu0
      %v1235 = vpop.f32.mrb[0].mxu0
      %v1236 = vadd.f32 %v787, %v1235
      %v1237 = vpop.f32.mrb[0].mxu0
      %1238 = vmatprep.mubr.bf16.mxu0 0
      %1239 = vmatmul.mubr.bf16.gmra.mrb[0].mxu0 %v546
      %v1240 = vpop.f32.mrb[0].mxu0
      %v1241 = vadd.f32 %v792, %v1240
      %v1242 = vpop.f32.mrb[0].mxu0
      %v1243 = vpop.f32.mrb[0].mxu0
      %v1244 = vadd.f32 %v795, %v1243
      %v1245 = vpop.f32.mrb[0].mxu0
      %1246 = vmatprep.mubr.bf16.mxu0 0
      %1247 = vmatmul.mubr.bf16.gmra.mrb[0].mxu0 %v549
      %v1248 = vpop.f32.mrb[0].mxu0
      %v1249 = vadd.f32 %v800, %v1248
      %v1250 = vpop.f32.mrb[0].mxu0
      %v1251 = vpop.f32.mrb[0].mxu0
      %v1252 = vadd.f32 %v803, %v1251
      %v1253 = vpop.f32.mrb[0].mxu0
      %1254 = vmatprep.mubr.bf16.mxu0 0
      %1255 = vmatmul.mubr.bf16.gmra.mrb[0].mxu0 %v552
      %v1256 = vpop.f32.mrb[0].mxu0
      %v1257 = vadd.f32 %v808, %v1256
      %v1258 = vpop.f32.mrb[0].mxu0
      %v1259 = vpop.f32.mrb[0].mxu0
      %v1260 = vadd.f32 %v811, %v1259
      %v1261 = vpop.f32.mrb[0].mxu0
      %1262 = vmatprep.mubr.bf16.mxu0 0
      %1263 = vmatmul.mubr.bf16.gmra.mrb[0].mxu0 %v555
      %v1264 = vpop.f32.mrb[0].mxu0
      %v1265 = vadd.f32 %v816, %v1264
      %v1266 = vpop.f32.mrb[0].mxu0
      %v1267 = vpop.f32.mrb[0].mxu0
      %v1268 = vadd.f32 %v819, %v1267
      %v1269 = vpop.f32.mrb[0].mxu0
      %1270 = vmatprep.mubr.bf16.mxu0 0
      %1271 = vmatmul.mubr.bf16.gmra.mrb[0].mxu0 %v558
      %v1272 = vpop.f32.mrb[0].mxu0
      %v1273 = vadd.f32 %v824, %v1272
      %v1274 = vpop.f32.mrb[0].mxu0
      %v1275 = vpop.f32.mrb[0].mxu0
      %v1276 = vadd.f32 %v827, %v1275
      %v1277 = vpop.f32.mrb[0].mxu0
      %1278 = vmatprep.mubr.bf16.mxu0 0
      %1279 = vmatmul.mubr.bf16.gmra.mrb[0].mxu0 %v561
      %v1280 = vpop.f32.mrb[0].mxu0
      %v1281 = vadd.f32 %v832, %v1280
      %v1282 = vpop.f32.mrb[0].mxu0
      %v1283 = vpop.f32.mrb[0].mxu0
      %v1284 = vadd.f32 %v835, %v1283
      %v1285 = vpop.f32.mrb[0].mxu0
      %1286 = vmatprep.mubr.bf16.mxu0 0
      %1287 = vmatmul.mubr.bf16.gmra.mrb[0].mxu0 %v564
      %v1288 = vpop.f32.mrb[0].mxu0
      %v1289 = vadd.f32 %v840, %v1288
      %v1290 = vpop.f32.mrb[0].mxu0
      %v1291 = vpop.f32.mrb[0].mxu0
      %v1292 = vadd.f32 %v843, %v1291
      %v1293 = vpop.f32.mrb[0].mxu0
      %1294 = vmatprep.mubr.bf16.mxu0 0
      %1295 = vmatmul.mubr.bf16.gmra.mrb[0].mxu0 %v567
      %v1296 = vpop.f32.mrb[0].mxu0
      %v1297 = vadd.f32 %v848, %v1296
      %v1298 = vpop.f32.mrb[0].mxu0
      %v1299 = vpop.f32.mrb[0].mxu0
      %v1300 = vadd.f32 %v851, %v1299
      %v1301 = vpop.f32.mrb[0].mxu0
      %1302 = vmatprep.mubr.bf16.mxu0 0
      %1303 = vmatmul.mubr.bf16.gmra.mrb[0].mxu0 %v570
      %v1304 = vpop.f32.mrb[0].mxu0
      %v1305 = vadd.f32 %v856, %v1304
      %v1306 = vpop.f32.mrb[0].mxu0
      %v1307 = vpop.f32.mrb[0].mxu0
      %v1308 = vadd.f32 %v859, %v1307
      %v1309 = vpop.f32.mrb[0].mxu0
      %1310 = vmatprep.mubr.bf16.mxu0 0
      %1311 = vmatmul.mubr.bf16.gmra.mrb[0].mxu0 %v573
      %v1312 = vpop.f32.mrb[0].mxu0
      %v1313 = vadd.f32 %v864, %v1312
      %v1314 = vpop.f32.mrb[0].mxu0
      %v1315 = vpop.f32.mrb[0].mxu0
      %v1316 = vadd.f32 %v867, %v1315
      %v1317 = vpop.f32.mrb[0].mxu0
      %1318 = vmatprep.mubr.bf16.mxu0 0
      %1319 = vmatmul.mubr.bf16.gmra.mrb[0].mxu0 %v576
      %v1320 = vpop.f32.mrb[0].mxu0
      %v1321 = vadd.f32 %v872, %v1320
      %v1322 = vpop.f32.mrb[0].mxu0
      %v1323 = vpop.f32.mrb[0].mxu0
      %v1324 = vadd.f32 %v875, %v1323
      %v1325 = vpop.f32.mrb[0].mxu0
      %1326 = vmatprep.mubr.bf16.mxu0 0
      %1327 = vmatmul.mubr.bf16.gmra.mrb[0].mxu0 %v579
      %v1328 = vpop.f32.mrb[0].mxu0
      %v1329 = vadd.f32 %v880, %v1328
      %v1330 = vpop.f32.mrb[0].mxu0
      %v1331 = vpop.f32.mrb[0].mxu0
      %v1332 = vadd.f32 %v883, %v1331
      %v1333 = vpop.f32.mrb[0].mxu0
      %1334 = vmatprep.mubr.bf16.mxu0 0
      %1335 = vmatmul.mubr.bf16.gmra.mrb[0].mxu0 %v582
      %v1336 = vpop.f32.mrb[0].mxu0
      %v1337 = vadd.f32 %v888, %v1336
      %v1338 = vpop.f32.mrb[0].mxu0
      %v1339 = vpop.f32.mrb[0].mxu0
      %v1340 = vadd.f32 %v891, %v1339
      %v1341 = vpop.f32.mrb[0].mxu0
      %1342 = vmatprep.mubr.bf16.mxu0 0
      %1343 = vmatmul.mubr.bf16.gmra.mrb[0].mxu0 %v585
      %v1344 = vpop.f32.mrb[0].mxu0
      %v1345 = vadd.f32 %v896, %v1344
      %v1346 = vpop.f32.mrb[0].mxu0
      %v1347 = vpop.f32.mrb[0].mxu0
      %v1348 = vadd.f32 %v899, %v1347
      %v1349 = vpop.f32.mrb[0].mxu0
      %1350 = vmatprep.mubr.bf16.mxu0 0
      %1351 = vmatmul.mubr.bf16.gmra.mrb[0].mxu0 %v588
      %v1352 = vpop.f32.mrb[0].mxu0
      %v1353 = vadd.f32 %v904, %v1352
      %v1354 = vpop.f32.mrb[0].mxu0
      %v1355 = vpop.f32.mrb[0].mxu0
      %v1356 = vadd.f32 %v907, %v1355
      %v1357 = vpop.f32.mrb[0].mxu0
      %1358 = vmatprep.mubr.bf16.mxu0 0
      %1359 = vmatmul.mubr.bf16.gmra.mrb[0].mxu0 %v591
      %v1360 = vpop.f32.mrb[0].mxu0
      %v1361 = vadd.f32 %v912, %v1360
      %v1362 = vpop.f32.mrb[0].mxu0
      %v1363 = vpop.f32.mrb[0].mxu0
      %v1364 = vadd.f32 %v915, %v1363
      %v1365 = vpop.f32.mrb[0].mxu0
      %1366 = vmatprep.mubr.bf16.mxu0 0
      %1367 = vmatmul.mubr.bf16.gmra.mrb[0].mxu0 %v594
      %v1368 = vpop.f32.mrb[0].mxu0
      %v1369 = vadd.f32 %v920, %v1368
      %v1370 = vpop.f32.mrb[0].mxu0
      %v1371 = vpop.f32.mrb[0].mxu0
      %v1372 = vadd.f32 %v923, %v1371
      %v1373 = vpop.f32.mrb[0].mxu0
      %1374 = vmatprep.mubr.bf16.mxu0 0
      %1375 = vmatmul.mubr.bf16.gmra.mrb[0].mxu0 %v597
      %v1376 = vpop.f32.mrb[0].mxu0
      %v1377 = vadd.f32 %v928, %v1376
      %v1378 = vpop.f32.mrb[0].mxu0
      %v1379 = vpop.f32.mrb[0].mxu0
      %v1380 = vadd.f32 %v931, %v1379
      %v1381 = vpop.f32.mrb[0].mxu0
      %1382 = vmatprep.mubr.bf16.mxu0 0
      %1383 = vmatmul.mubr.bf16.gmra.mrb[0].mxu0 %v600
      %v1384 = vpop.f32.mrb[0].mxu0
      %v1385 = vadd.f32 %v936, %v1384
      %v1386 = vpop.f32.mrb[0].mxu0
      %v1387 = vpop.f32.mrb[0].mxu0
      %v1388 = vadd.f32 %v939, %v1387
      %v1389 = vpop.f32.mrb[0].mxu0
      %1390 = vmatprep.mubr.bf16.mxu0 0
      %1391 = vmatmul.mubr.bf16.gmra.mrb[0].mxu0 %v603
      %v1392 = vpop.f32.mrb[0].mxu0
      %v1393 = vadd.f32 %v944, %v1392
      %v1394 = vpop.f32.mrb[0].mxu0
      %v1395 = vpop.f32.mrb[0].mxu0
      %v1396 = vadd.f32 %v947, %v1395
      %v1397 = vpop.f32.mrb[0].mxu0
      %1398 = vmatprep.mubr.bf16.mxu0 0
      %1399 = vmatmul.mubr.bf16.gmra.mrb[0].mxu0 %v606
      %v1400 = vpop.f32.mrb[0].mxu0
      %v1401 = vadd.f32 %v952, %v1400
      %v1402 = vpop.f32.mrb[0].mxu0
      %v1403 = vpop.f32.mrb[0].mxu0
      %v1404 = vadd.f32 %v955, %v1403
      %v1405 = vpop.f32.mrb[0].mxu0
      %1406 = vmatprep.mubr.bf16.mxu0 0
      %1407 = vmatmul.mubr.bf16.gmra.mrb[0].mxu0 %v609
      %v1408 = vpop.f32.mrb[0].mxu0
      %v1409 = vadd.f32 %v960, %v1408
      %v1410 = vpop.f32.mrb[0].mxu0
      %v1411 = vpop.f32.mrb[0].mxu0
      %v1412 = vadd.f32 %v963, %v1411
      %v1413 = vpop.f32.mrb[0].mxu0
      %1414 = vmatprep.mubr.bf16.mxu0 0
      %1415 = vmatmul.mubr.bf16.gmra.mrb[0].mxu0 %v612
      %v1416 = vpop.f32.mrb[0].mxu0
      %v1417 = vadd.f32 %v968, %v1416
      %v1418 = vpop.f32.mrb[0].mxu0
      %v1419 = vpop.f32.mrb[0].mxu0
      %v1420 = vadd.f32 %v971, %v1419
      %v1421 = vpop.f32.mrb[0].mxu0
      %1422 = vmatprep.mubr.bf16.mxu0 0
      %1423 = vmatmul.mubr.bf16.gmra.mrb[0].mxu0 %v615
      %v1424 = vpop.f32.mrb[0].mxu0
      %v1425 = vadd.f32 %v976, %v1424
      %v1426 = vpop.f32.mrb[0].mxu0
      %v1427 = vpop.f32.mrb[0].mxu0
      %v1428 = vadd.f32 %v979, %v1427
      %v1429 = vpop.f32.mrb[0].mxu0
      %1430 = vmatprep.mubr.bf16.mxu0 0
      %1431 = vmatmul.mubr.bf16.gmra.mrb[0].mxu0 %v618
      %v1432 = vpop.f32.mrb[0].mxu0
      %v1433 = vadd.f32 %v984, %v1432
      %v1434 = vpop.f32.mrb[0].mxu0
      %v1435 = vpop.f32.mrb[0].mxu0
      %v1436 = vadd.f32 %v987, %v1435
      %v1437 = vpop.f32.mrb[0].mxu0
      %1438 = vmatprep.mubr.bf16.mxu0 0
      %1439 = vmatmul.mubr.bf16.gmra.mrb[0].mxu0 %v621
      %v1440 = vpop.f32.mrb[0].mxu0
      %v1441 = vadd.f32 %v992, %v1440
      %v1442 = vpop.f32.mrb[0].mxu0
      %v1443 = vpop.f32.mrb[0].mxu0
      %v1444 = vadd.f32 %v995, %v1443
      %v1445 = vpop.f32.mrb[0].mxu0
      %1446 = vmatprep.mubr.bf16.mxu0 0
      %1447 = vmatmul.mubr.bf16.gmra.mrb[0].mxu0 %v624
      %v1448 = vpop.f32.mrb[0].mxu0
      %v1449 = vadd.f32 %v1000, %v1448
      %v1450 = vpop.f32.mrb[0].mxu0
      %v1451 = vpop.f32.mrb[0].mxu0
      %v1452 = vadd.f32 %v1003, %v1451
      %v1453 = vpop.f32.mrb[0].mxu0
      %1454 = vmatprep.mubr.bf16.mxu0 0
      %1455 = vmatmul.mubr.bf16.gmra.mrb[0].mxu0 %v627
      %v1456 = vpop.f32.mrb[0].mxu0
      %v1457 = vadd.f32 %v1008, %v1456
      %v1458 = vpop.f32.mrb[0].mxu0
      %v1459 = vpop.f32.mrb[0].mxu0
      %v1460 = vadd.f32 %v1011, %v1459
      %v1461 = vpop.f32.mrb[0].mxu0
      %1462 = vmatprep.mubr.bf16.mxu0 0
      %1463 = vmatmul.mubr.bf16.gmra.mrb[0].mxu0 %v630
      %v1464 = vpop.f32.mrb[0].mxu0
      %v1465 = vadd.f32 %v1016, %v1464
      %v1466 = vpop.f32.mrb[0].mxu0
      %v1467 = vpop.f32.mrb[0].mxu0
      %v1468 = vadd.f32 %v1019, %v1467
      %v1469 = vpop.f32.mrb[0].mxu0
      %1470 = vmatprep.mubr.bf16.mxu0 0
      %1471 = vmatmul.mubr.bf16.gmra.mrb[0].mxu0 %v633
      %v1472 = vpop.f32.mrb[0].mxu0
      %v1473 = vadd.f32 %v1024, %v1472
      %v1474 = vpop.f32.mrb[0].mxu0
      %v1475 = vpop.f32.mrb[0].mxu0
      %v1476 = vadd.f32 %v1027, %v1475
      %v1477 = vpop.f32.mrb[0].mxu0
      %1478 = vmatprep.mubr.bf16.mxu0 0
      %1479 = vmatmul.mubr.bf16.gmra.mrb[0].mxu0 %v636
      %v1480 = vpop.f32.mrb[0].mxu0
      %v1481 = vadd.f32 %v1032, %v1480
      %v1482 = vpop.f32.mrb[0].mxu0
      %v1483 = vpop.f32.mrb[0].mxu0
      %v1484 = vadd.f32 %v1035, %v1483
      %v1485 = vpop.f32.mrb[0].mxu0
      %1486 = vmatprep.mubr.bf16.mxu0 0
      %1487 = vmatmul.mubr.bf16.gmra.mrb[0].mxu0 %v639
      %v1488 = vpop.f32.mrb[0].mxu0
      %v1489 = vadd.f32 %v1040, %v1488
      %v1490 = vpop.f32.mrb[0].mxu0
      %v1491 = vpop.f32.mrb[0].mxu0
      %v1492 = vadd.f32 %v1043, %v1491
      %v1493 = vpop.f32.mrb[0].mxu0
      %1494 = vmatprep.mubr.bf16.mxu0 0
      %1495 = vmatmul.mubr.bf16.gmra.mrb[0].mxu0 %v642
      %v1496 = vpop.f32.mrb[0].mxu0
      %v1497 = vadd.f32 %v1048, %v1496
      %v1498 = vpop.f32.mrb[0].mxu0
      %v1499 = vpop.f32.mrb[0].mxu0
      %v1500 = vadd.f32 %v1051, %v1499
      %v1501 = vpop.f32.mrb[0].mxu0
      %1502 = vmatprep.mubr.bf16.mxu0 0
      %1503 = vmatmul.mubr.bf16.gmra.mrb[0].mxu0 %v645
      %v1504 = vpop.f32.mrb[0].mxu0
      %v1505 = vadd.f32 %v1056, %v1504
      %v1506 = vpop.f32.mrb[0].mxu0
      %v1507 = vpop.f32.mrb[0].mxu0
      %v1508 = vadd.f32 %v1059, %v1507
      %v1509 = vpop.f32.mrb[0].mxu0
      %1510 = vmatprep.mubr.bf16.mxu0 0
      %1511 = vmatmul.mubr.bf16.gmra.mrb[0].mxu0 %v648
      %v1512 = vpop.f32.mrb[0].mxu0
      %v1513 = vadd.f32 %v1064, %v1512
      %v1514 = vpop.f32.mrb[0].mxu0
      %v1515 = vpop.f32.mrb[0].mxu0
      %v1516 = vadd.f32 %v1067, %v1515
      %v1517 = vpop.f32.mrb[0].mxu0
      %1518 = vmatprep.mubr.bf16.mxu0 0
      %1519 = vmatmul.mubr.bf16.gmra.mrb[0].mxu0 %v651
      %v1520 = vpop.f32.mrb[0].mxu0
      %v1521 = vadd.f32 %v1072, %v1520
      %v1522 = vpop.f32.mrb[0].mxu0
      %v1523 = vpop.f32.mrb[0].mxu0
      %v1524 = vadd.f32 %v1075, %v1523
      %v1525 = vpop.f32.mrb[0].mxu0
      %1526 = vmatprep.mubr.bf16.mxu0 0
      %1527 = vmatmul.mubr.bf16.gmra.mrb[0].mxu0 %v654
      %v1528 = vpop.f32.mrb[0].mxu0
      %v1529 = vadd.f32 %v1080, %v1528
      %v1530 = vpop.f32.mrb[0].mxu0
      %v1531 = vpop.f32.mrb[0].mxu0
      %v1532 = vadd.f32 %v1083, %v1531
      %v1533 = vpop.f32.mrb[0].mxu0
      %1534 = vdwg.mxu0
      %v1535 = vld [vmem:[%s163 + $0x30] sm:$0xf]
      %v1536 = vld [vmem:[%s163 + $0x34] sm:$0xf]
      %v1537 = vld [vmem:[%s163 + $0x38] sm:$0xf]
      %v1538 = vld [vmem:[%s163 + $0x3c] sm:$0xf]
      %v1539 = vld [vmem:[%s163 + $0x40] sm:$0xf]
      %v1540 = vld [vmem:[%s163 + $0x44] sm:$0xf]
      %v1541 = vld [vmem:[%s163 + $0x48] sm:$0xf]
      %v1542 = vld [vmem:[%s163 + $0x4c] sm:$0xf]
      %v1543 = vld [vmem:[%s163 + $0x50] sm:$0xf]
      %v1544 = vld [vmem:[%s163 + $0x54] sm:$0xf]
      %v1545 = vld [vmem:[%s163 + $0x58] sm:$0xf]
      %v1546 = vld [vmem:[%s163 + $0x5c] sm:$0xf]
      %v1547 = vld [vmem:[%s163 + $0x60] sm:$0xf]
      %v1548 = vld [vmem:[%s163 + $0x64] sm:$0xf]
      %v1549 = vld [vmem:[%s163 + $0x68] sm:$0xf]
      %v1550 = vld [vmem:[%s163 + $0x6c] sm:$0xf]
      %v1551 = vld [vmem:[%s163 + $0x70] sm:$0xf]
      %v1552 = vld [vmem:[%s163 + $0x74] sm:$0xf]
      %v1553 = vld [vmem:[%s163 + $0x78] sm:$0xf]
      %v1554 = vld [vmem:[%s163 + $0x7c] sm:$0xf]
      %v1555 = vld [vmem:[%s163 + $0x80] sm:$0xf]
      %v1556 = vld [vmem:[%s163 + $0x84] sm:$0xf]
      %v1557 = vld [vmem:[%s163 + $0x88] sm:$0xf]
      %v1558 = vld [vmem:[%s163 + $0x8c] sm:$0xf]
      %v1559 = vld [vmem:[%s163 + $0x90] sm:$0xf]
      %v1560 = vld [vmem:[%s163 + $0x94] sm:$0xf]
      %v1561 = vld [vmem:[%s163 + $0x98] sm:$0xf]
      %v1562 = vld [vmem:[%s163 + $0x9c] sm:$0xf]
      %v1563 = vld [vmem:[%s163 + $0xa0] sm:$0xf]
      %v1564 = vld [vmem:[%s163 + $0xa4] sm:$0xf]
      %v1565 = vld [vmem:[%s163 + $0xa8] sm:$0xf]
      %v1566 = vld [vmem:[%s163 + $0xac] sm:$0xf]
      %v1567 = vld [vmem:[%s163 + $0xb0] sm:$0xf]
      %v1568 = vld [vmem:[%s163 + $0xb4] sm:$0xf]
      %v1569 = vld [vmem:[%s163 + $0xb8] sm:$0xf]
      %v1570 = vld [vmem:[%s163 + $0xbc] sm:$0xf]
      %v1571 = vld [vmem:[%s163 + $0xc0] sm:$0xf]
      %v1572 = vld [vmem:[%s163 + $0xc4] sm:$0xf]
      %v1573 = vld [vmem:[%s163 + $0xc8] sm:$0xf]
      %v1574 = vld [vmem:[%s163 + $0xcc] sm:$0xf]
      %v1575 = vld [vmem:[%s163 + $0xd0] sm:$0xf]
      %v1576 = vld [vmem:[%s163 + $0xd4] sm:$0xf]
      %v1577 = vld [vmem:[%s163 + $0xd8] sm:$0xf]
      %v1578 = vld [vmem:[%s163 + $0xdc] sm:$0xf]
      %v1579 = vld [vmem:[%s163 + $0xe0] sm:$0xf]
      %v1580 = vld [vmem:[%s163 + $0xe4] sm:$0xf]
      %v1581 = vld [vmem:[%s163 + $0xe8] sm:$0xf]
      %v1582 = vld [vmem:[%s163 + $0xec] sm:$0xf]
      %v1583 = vld [vmem:[%s163 + $0xf0] sm:$0xf]
      %v1584 = vld [vmem:[%s163 + $0xf4] sm:$0xf]
      %v1585 = vld [vmem:[%s163 + $0xf8] sm:$0xf]
      %v1586 = vld [vmem:[%s163 + $0xfc] sm:$0xf]
      %v1587 = vld [vmem:[%s163 + $0x100] sm:$0xf]
      %v1588 = vld [vmem:[%s163 + $0x104] sm:$0xf]
      %v1589 = vld [vmem:[%s163 + $0x108] sm:$0xf]
      %v1590 = vld [vmem:[%s163 + $0x10c] sm:$0xf]
      %v1591 = vld [vmem:[%s163 + $0x110] sm:$0xf]
      %v1592 = vld [vmem:[%s163 + $0x114] sm:$0xf]
      %v1593 = vld [vmem:[%s163 + $0x118] sm:$0xf]
      %v1594 = vld [vmem:[%s163 + $0x11c] sm:$0xf]
      %v1595 = vld [vmem:[%s163 + $0x120] sm:$0xf]
      %v1596 = vld [vmem:[%s163 + $0x124] sm:$0xf]
      %v1597 = vld [vmem:[%s163 + $0x128] sm:$0xf]
      %v1598 = vld [vmem:[%s163 + $0x12c] sm:$0xf]
      %v1599 = vld [vmem:[%s163 + $0x130] sm:$0xf]
      %v1600 = vld [vmem:[%s163 + $0x134] sm:$0xf]
      %v1601 = vld [vmem:[%s163 + $0x138] sm:$0xf]
      %v1602 = vld [vmem:[%s163 + $0x13c] sm:$0xf]
      %v1603 = vld [vmem:[%s163 + $0x140] sm:$0xf]
      %v1604 = vld [vmem:[%s163 + $0x144] sm:$0xf]
      %v1605 = vld [vmem:[%s163 + $0x148] sm:$0xf]
      %v1606 = vld [vmem:[%s163 + $0x14c] sm:$0xf]
      %v1607 = vld [vmem:[%s163 + $0x150] sm:$0xf]
      %v1608 = vld [vmem:[%s163 + $0x154] sm:$0xf]
      %v1609 = vld [vmem:[%s163 + $0x158] sm:$0xf]
      %v1610 = vld [vmem:[%s163 + $0x15c] sm:$0xf]
      %v1611 = vld [vmem:[%s163 + $0x160] sm:$0xf]
      %v1612 = vld [vmem:[%s163 + $0x164] sm:$0xf]
      %v1613 = vld [vmem:[%s163 + $0x168] sm:$0xf]
      %v1614 = vld [vmem:[%s163 + $0x16c] sm:$0xf]
      %v1615 = vld [vmem:[%s163 + $0x170] sm:$0xf]
      %v1616 = vld [vmem:[%s163 + $0x174] sm:$0xf]
      %v1617 = vld [vmem:[%s163 + $0x178] sm:$0xf]
      %v1618 = vld [vmem:[%s163 + $0x17c] sm:$0xf]
      %v1619 = vld [vmem:[%s163 + $0x180] sm:$0xf]
      %v1620 = vld [vmem:[%s163 + $0x184] sm:$0xf]
      %v1621 = vld [vmem:[%s163 + $0x188] sm:$0xf]
      %v1622 = vld [vmem:[%s163 + $0x18c] sm:$0xf]
      %v1623 = vld [vmem:[%s163 + $0x190] sm:$0xf]
      %v1624 = vld [vmem:[%s163 + $0x194] sm:$0xf]
      %v1625 = vld [vmem:[%s163 + $0x198] sm:$0xf]
      %v1626 = vld [vmem:[%s163 + $0x19c] sm:$0xf]
      %v1627 = vld [vmem:[%s163 + $0x1a0] sm:$0xf]
      %v1628 = vld [vmem:[%s163 + $0x1a4] sm:$0xf]
      %v1629 = vld [vmem:[%s163 + $0x1a8] sm:$0xf]
      %v1630 = vld [vmem:[%s163 + $0x1ac] sm:$0xf]
      %s1631 = scalar_lea.vmem %s1, 16
      %v1632 = vld [vmem:[%s1631] sm:$0xf]
      %v1633 = vld [vmem:[%s1631 + $0x4] sm:$0x3]
      %v1730 = vunpack.c.l.b16 %v1535
      %v1731 = vunpack.c.l.b16 %v1536
      %v1732 = vunpack.c.l.b16 %v1537
      %v1733 = vunpack.c.l.b16 %v1538
      %v1734 = vunpack.c.l.b16 %v1539
      %v1735 = vunpack.c.l.b16 %v1540
      %v1736 = vunpack.c.l.b16 %v1541
      %v1737 = vunpack.c.l.b16 %v1542
      %v1738 = vunpack.c.l.b16 %v1543
      %v1739 = vunpack.c.l.b16 %v1544
      %v1740 = vunpack.c.l.b16 %v1545
      %v1741 = vunpack.c.l.b16 %v1546
      %v1742 = vunpack.c.l.b16 %v1547
      %v1743 = vunpack.c.l.b16 %v1548
      %v1744 = vunpack.c.l.b16 %v1549
      %v1745 = vunpack.c.l.b16 %v1550
      %v1746 = vunpack.c.l.b16 %v1551
      %v1747 = vunpack.c.l.b16 %v1552
      %v1748 = vunpack.c.l.b16 %v1553
      %v1749 = vunpack.c.l.b16 %v1554
      %v1750 = vunpack.c.l.b16 %v1555
      %v1751 = vunpack.c.l.b16 %v1556
      %v1752 = vunpack.c.l.b16 %v1557
      %v1753 = vunpack.c.l.b16 %v1558
      %v1754 = vunpack.c.l.b16 %v1559
      %v1755 = vunpack.c.l.b16 %v1560
      %v1756 = vunpack.c.l.b16 %v1561
      %v1757 = vunpack.c.l.b16 %v1562
      %v1758 = vunpack.c.l.b16 %v1563
      %v1759 = vunpack.c.l.b16 %v1564
      %v1760 = vunpack.c.l.b16 %v1565
      %v1761 = vunpack.c.l.b16 %v1566
      %v1762 = vunpack.c.l.b16 %v1567
      %v1763 = vunpack.c.l.b16 %v1568
      %v1764 = vunpack.c.l.b16 %v1569
      %v1765 = vunpack.c.l.b16 %v1570
      %v1766 = vunpack.c.l.b16 %v1571
      %v1767 = vunpack.c.l.b16 %v1572
      %v1768 = vunpack.c.l.b16 %v1573
      %v1769 = vunpack.c.l.b16 %v1574
      %v1770 = vunpack.c.l.b16 %v1575
      %v1771 = vunpack.c.l.b16 %v1576
      %v1772 = vunpack.c.l.b16 %v1577
      %v1773 = vunpack.c.l.b16 %v1578
      %v1774 = vunpack.c.l.b16 %v1579
      %v1775 = vunpack.c.l.b16 %v1580
      %v1776 = vunpack.c.l.b16 %v1581
      %v1777 = vunpack.c.l.b16 %v1582
      %v1778 = vunpack.c.l.b16 %v1583
      %v1779 = vunpack.c.l.b16 %v1584
      %v1780 = vunpack.c.l.b16 %v1585
      %v1781 = vunpack.c.l.b16 %v1586
      %v1782 = vunpack.c.l.b16 %v1587
      %v1783 = vunpack.c.l.b16 %v1588
      %v1784 = vunpack.c.l.b16 %v1589
      %v1785 = vunpack.c.l.b16 %v1590
      %v1786 = vunpack.c.l.b16 %v1591
      %v1787 = vunpack.c.l.b16 %v1592
      %v1788 = vunpack.c.l.b16 %v1593
      %v1789 = vunpack.c.l.b16 %v1594
      %v1790 = vunpack.c.l.b16 %v1595
      %v1791 = vunpack.c.l.b16 %v1596
      %v1792 = vunpack.c.l.b16 %v1597
      %v1793 = vunpack.c.l.b16 %v1598
      %v1794 = vunpack.c.l.b16 %v1599
      %v1795 = vunpack.c.l.b16 %v1600
      %v1796 = vunpack.c.l.b16 %v1601
      %v1797 = vunpack.c.l.b16 %v1602
      %v1798 = vunpack.c.l.b16 %v1603
      %v1799 = vunpack.c.l.b16 %v1604
      %v1800 = vunpack.c.l.b16 %v1605
      %v1801 = vunpack.c.l.b16 %v1606
      %v1802 = vunpack.c.l.b16 %v1607
      %v1803 = vunpack.c.l.b16 %v1608
      %v1804 = vunpack.c.l.b16 %v1609
      %v1805 = vunpack.c.l.b16 %v1610
      %v1806 = vunpack.c.l.b16 %v1611
      %v1807 = vunpack.c.l.b16 %v1612
      %v1808 = vunpack.c.l.b16 %v1613
      %v1809 = vunpack.c.l.b16 %v1614
      %v1810 = vunpack.c.l.b16 %v1615
      %v1811 = vunpack.c.l.b16 %v1616
      %v1812 = vunpack.c.l.b16 %v1617
      %v1813 = vunpack.c.l.b16 %v1618
      %v1814 = vunpack.c.l.b16 %v1619
      %v1815 = vunpack.c.l.b16 %v1620
      %v1816 = vunpack.c.l.b16 %v1621
      %v1817 = vunpack.c.l.b16 %v1622
      %v1818 = vunpack.c.l.b16 %v1623
      %v1819 = vunpack.c.l.b16 %v1624
      %v1820 = vunpack.c.l.b16 %v1625
      %v1821 = vunpack.c.l.b16 %v1626
      %v1822 = vunpack.c.l.b16 %v1627
      %v1823 = vunpack.c.l.b16 %v1628
      %v1824 = vunpack.c.l.b16 %v1629
      %v1825 = vunpack.c.l.b16 %v1630
      %v1826 = vpack.c.b16 %v1731, %v1730
      %v1827 = vpack.c.b16 %v1733, %v1732
      %v1828 = vpack.c.b16 %v1735, %v1734
      %v1829 = vpack.c.b16 %v1737, %v1736
      %v1830 = vpack.c.b16 %v1739, %v1738
      %v1831 = vpack.c.b16 %v1741, %v1740
      %v1832 = vpack.c.b16 %v1743, %v1742
      %v1833 = vpack.c.b16 %v1745, %v1744
      %v1834 = vpack.c.b16 %v1747, %v1746
      %v1835 = vpack.c.b16 %v1749, %v1748
      %v1836 = vpack.c.b16 %v1751, %v1750
      %v1837 = vpack.c.b16 %v1753, %v1752
      %v1838 = vpack.c.b16 %v1755, %v1754
      %v1839 = vpack.c.b16 %v1757, %v1756
      %v1840 = vpack.c.b16 %v1759, %v1758
      %v1841 = vpack.c.b16 %v1761, %v1760
      %v1842 = vpack.c.b16 %v1763, %v1762
      %v1843 = vpack.c.b16 %v1765, %v1764
      %v1844 = vpack.c.b16 %v1767, %v1766
      %v1845 = vpack.c.b16 %v1769, %v1768
      %v1846 = vpack.c.b16 %v1771, %v1770
      %v1847 = vpack.c.b16 %v1773, %v1772
      %v1848 = vpack.c.b16 %v1775, %v1774
      %v1849 = vpack.c.b16 %v1777, %v1776
      %v1850 = vpack.c.b16 %v1779, %v1778
      %v1851 = vpack.c.b16 %v1781, %v1780
      %v1852 = vpack.c.b16 %v1783, %v1782
      %v1853 = vpack.c.b16 %v1785, %v1784
      %v1854 = vpack.c.b16 %v1787, %v1786
      %v1855 = vpack.c.b16 %v1789, %v1788
      %v1856 = vpack.c.b16 %v1791, %v1790
      %v1857 = vpack.c.b16 %v1793, %v1792
      %v1858 = vpack.c.b16 %v1795, %v1794
      %v1859 = vpack.c.b16 %v1797, %v1796
      %v1860 = vpack.c.b16 %v1799, %v1798
      %v1861 = vpack.c.b16 %v1801, %v1800
      %v1862 = vpack.c.b16 %v1803, %v1802
      %v1863 = vpack.c.b16 %v1805, %v1804
      %v1864 = vpack.c.b16 %v1807, %v1806
      %v1865 = vpack.c.b16 %v1809, %v1808
      %v1866 = vpack.c.b16 %v1811, %v1810
      %v1867 = vpack.c.b16 %v1813, %v1812
      %v1868 = vpack.c.b16 %v1815, %v1814
      %v1869 = vpack.c.b16 %v1817, %v1816
      %v1870 = vpack.c.b16 %v1819, %v1818
      %v1871 = vpack.c.b16 %v1821, %v1820
      %v1872 = vpack.c.b16 %v1823, %v1822
      %v1873 = vpack.c.b16 %v1825, %v1824
      %v1876 = vunpack.c.l.b16 %v1632
      %v1877 = vunpack.c.l.b16 %v1633
      %v1878 = vpack.c.b16 %v1877, %v1876
      %v1880 = vsel %vm520, %v1826, 0
      %v1883 = vsel %vm520, %v1827, 0
      %v1886 = vsel %vm520, %v1828, 0
      %v1889 = vsel %vm520, %v1829, 0
      %v1892 = vsel %vm520, %v1830, 0
      %v1895 = vsel %vm520, %v1831, 0
      %v1898 = vsel %vm520, %v1832, 0
      %v1901 = vsel %vm520, %v1833, 0
      %v1904 = vsel %vm520, %v1834, 0
      %v1907 = vsel %vm520, %v1835, 0
      %v1910 = vsel %vm520, %v1836, 0
      %v1913 = vsel %vm520, %v1837, 0
      %v1916 = vsel %vm520, %v1838, 0
      %v1919 = vsel %vm520, %v1839, 0
      %v1922 = vsel %vm520, %v1840, 0
      %v1925 = vsel %vm520, %v1841, 0
      %v1928 = vsel %vm520, %v1842, 0
      %v1931 = vsel %vm520, %v1843, 0
      %v1934 = vsel %vm520, %v1844, 0
      %v1937 = vsel %vm520, %v1845, 0
      %v1940 = vsel %vm520, %v1846, 0
      %v1943 = vsel %vm520, %v1847, 0
      %v1946 = vsel %vm520, %v1848, 0
      %v1949 = vsel %vm520, %v1849, 0
      %v1952 = vsel %vm520, %v1850, 0
      %v1955 = vsel %vm520, %v1851, 0
      %v1958 = vsel %vm520, %v1852, 0
      %v1961 = vsel %vm520, %v1853, 0
      %v1964 = vsel %vm520, %v1854, 0
      %v1967 = vsel %vm520, %v1855, 0
      %v1970 = vsel %vm520, %v1856, 0
      %v1973 = vsel %vm520, %v1857, 0
      %v1976 = vsel %vm520, %v1858, 0
      %v1979 = vsel %vm520, %v1859, 0
      %v1982 = vsel %vm520, %v1860, 0
      %v1985 = vsel %vm520, %v1861, 0
      %v1988 = vsel %vm520, %v1862, 0
      %v1991 = vsel %vm520, %v1863, 0
      %v1994 = vsel %vm520, %v1864, 0
      %v1997 = vsel %vm520, %v1865, 0
      %v2000 = vsel %vm520, %v1866, 0
      %v2003 = vsel %vm520, %v1867, 0
      %v2006 = vsel %vm520, %v1868, 0
      %v2009 = vsel %vm520, %v1869, 0
      %v2012 = vsel %vm520, %v1870, 0
      %v2015 = vsel %vm520, %v1871, 0
      %v2018 = vsel %vm520, %v1872, 0
      %v2021 = vsel %vm520, %v1873, 0
      %v2024 = vsel %vm665, %v1878, 0
      %2026 = vmatprep.subr.bf16.mxu0 0
      %2027 = vmatpush1.bf16.msra.mxu0 %v2024
      %2028 = vmatprep.subr.bf16.mxu0 0
      %2029 = vmatpush1.bf16.msra.mxu0 0
      %2030 = vmatprep.subr.bf16.mxu0 0
      %2031 = vmatpush1.bf16.msra.mxu0 0
      %2032 = vmatprep.subr.bf16.mxu0 0
      %2033 = vmatpush1.bf16.msra.mxu0 0
      %2034 = vmatprep.subr.bf16.mxu0 0
      %2035 = vmatpush1.bf16.msra.mxu0 0
      %2036 = vmatprep.subr.bf16.mxu0 0
      %2037 = vmatpush1.bf16.msra.mxu0 0
      %2038 = vmatprep.subr.bf16.mxu0 0
      %2039 = vmatpush1.bf16.msra.mxu0 0
      %2040 = vmatprep.subr.bf16.mxu0 0
      %2041 = vmatpush1.bf16.msra.mxu0 0
      %2042 = vmatprep.subr.bf16.mxu0 0
      %2043 = vmatpush1.bf16.msra.mxu0 0
      %2044 = vmatprep.subr.bf16.mxu0 0
      %2045 = vmatpush1.bf16.msra.mxu0 0
      %2046 = vmatprep.subr.bf16.mxu0 0
      %2047 = vmatpush1.bf16.msra.mxu0 0
      %2048 = vmatprep.subr.bf16.mxu0 0
      %2049 = vmatpush1.bf16.msra.mxu0 0
      %2050 = vmatprep.subr.bf16.mxu0 0
      %2051 = vmatpush1.bf16.msra.mxu0 0
      %2052 = vmatprep.subr.bf16.mxu0 0
      %2053 = vmatpush1.bf16.msra.mxu0 0
      %2054 = vmatprep.subr.bf16.mxu0 0
      %2055 = vmatpush1.bf16.msra.mxu0 0
      %2056 = vmatprep.subr.bf16.mxu0 0
      %2057 = vmatpush1.bf16.msra.mxu0 0
      %2058 = vmatprep.mubr.bf16.mxu0 0
      %2059 = vmatmul.mubr.bf16.gmra.mrb[0].mxu0 %v1880
      %v2060 = vpop.f32.mrb[0].mxu0
      %v2061 = vadd.f32 0.0, %v2060
      %v2062 = vpop.f32.mrb[0].mxu0
      %v2063 = vpop.f32.mrb[0].mxu0
      %v2064 = vadd.f32 0.0, %v2063
      %v2065 = vpop.f32.mrb[0].mxu0
      %2066 = vmatprep.mubr.bf16.mxu0 0
      %2067 = vmatmul.mubr.bf16.gmra.mrb[0].mxu0 %v1883
      %v2068 = vpop.f32.mrb[0].mxu0
      %v2069 = vadd.f32 0.0, %v2068
      %v2070 = vpop.f32.mrb[0].mxu0
      %v2071 = vpop.f32.mrb[0].mxu0
      %v2072 = vadd.f32 0.0, %v2071
      %v2073 = vpop.f32.mrb[0].mxu0
      %2074 = vmatprep.mubr.bf16.mxu0 0
      %2075 = vmatmul.mubr.bf16.gmra.mrb[0].mxu0 %v1886
      %v2076 = vpop.f32.mrb[0].mxu0
      %v2077 = vadd.f32 0.0, %v2076
      %v2078 = vpop.f32.mrb[0].mxu0
      %v2079 = vpop.f32.mrb[0].mxu0
      %v2080 = vadd.f32 0.0, %v2079
      %v2081 = vpop.f32.mrb[0].mxu0
      %2082 = vmatprep.mubr.bf16.mxu0 0
      %2083 = vmatmul.mubr.bf16.gmra.mrb[0].mxu0 %v1889
      %v2084 = vpop.f32.mrb[0].mxu0
      %v2085 = vadd.f32 0.0, %v2084
      %v2086 = vpop.f32.mrb[0].mxu0
      %v2087 = vpop.f32.mrb[0].mxu0
      %v2088 = vadd.f32 0.0, %v2087
      %v2089 = vpop.f32.mrb[0].mxu0
      %2090 = vmatprep.mubr.bf16.mxu0 0
      %2091 = vmatmul.mubr.bf16.gmra.mrb[0].mxu0 %v1892
      %v2092 = vpop.f32.mrb[0].mxu0
      %v2093 = vadd.f32 0.0, %v2092
      %v2094 = vpop.f32.mrb[0].mxu0
      %v2095 = vpop.f32.mrb[0].mxu0
      %v2096 = vadd.f32 0.0, %v2095
      %v2097 = vpop.f32.mrb[0].mxu0
      %2098 = vmatprep.mubr.bf16.mxu0 0
      %2099 = vmatmul.mubr.bf16.gmra.mrb[0].mxu0 %v1895
      %v2100 = vpop.f32.mrb[0].mxu0
      %v2101 = vadd.f32 0.0, %v2100
      %v2102 = vpop.f32.mrb[0].mxu0
      %v2103 = vpop.f32.mrb[0].mxu0
      %v2104 = vadd.f32 0.0, %v2103
      %v2105 = vpop.f32.mrb[0].mxu0
      %2106 = vmatprep.mubr.bf16.mxu0 0
      %2107 = vmatmul.mubr.bf16.gmra.mrb[0].mxu0 %v1898
      %v2108 = vpop.f32.mrb[0].mxu0
      %v2109 = vadd.f32 0.0, %v2108
      %v2110 = vpop.f32.mrb[0].mxu0
      %v2111 = vpop.f32.mrb[0].mxu0
      %v2112 = vadd.f32 0.0, %v2111
      %v2113 = vpop.f32.mrb[0].mxu0
      %2114 = vmatprep.mubr.bf16.mxu0 0
      %2115 = vmatmul.mubr.bf16.gmra.mrb[0].mxu0 %v1901
      %v2116 = vpop.f32.mrb[0].mxu0
      %v2117 = vadd.f32 0.0, %v2116
      %v2118 = vpop.f32.mrb[0].mxu0
      %v2119 = vpop.f32.mrb[0].mxu0
      %v2120 = vadd.f32 0.0, %v2119
      %v2121 = vpop.f32.mrb[0].mxu0
      %2122 = vmatprep.mubr.bf16.mxu0 0
      %2123 = vmatmul.mubr.bf16.gmra.mrb[0].mxu0 %v1904
      %v2124 = vpop.f32.mrb[0].mxu0
      %v2125 = vadd.f32 0.0, %v2124
      %v2126 = vpop.f32.mrb[0].mxu0
      %v2127 = vpop.f32.mrb[0].mxu0
      %v2128 = vadd.f32 0.0, %v2127
      %v2129 = vpop.f32.mrb[0].mxu0
      %2130 = vmatprep.mubr.bf16.mxu0 0
      %2131 = vmatmul.mubr.bf16.gmra.mrb[0].mxu0 %v1907
      %v2132 = vpop.f32.mrb[0].mxu0
      %v2133 = vadd.f32 0.0, %v2132
      %v2134 = vpop.f32.mrb[0].mxu0
      %v2135 = vpop.f32.mrb[0].mxu0
      %v2136 = vadd.f32 0.0, %v2135
      %v2137 = vpop.f32.mrb[0].mxu0
      %2138 = vmatprep.mubr.bf16.mxu0 0
      %2139 = vmatmul.mubr.bf16.gmra.mrb[0].mxu0 %v1910
      %v2140 = vpop.f32.mrb[0].mxu0
      %v2141 = vadd.f32 0.0, %v2140
      %v2142 = vpop.f32.mrb[0].mxu0
      %v2143 = vpop.f32.mrb[0].mxu0
      %v2144 = vadd.f32 0.0, %v2143
      %v2145 = vpop.f32.mrb[0].mxu0
      %2146 = vmatprep.mubr.bf16.mxu0 0
      %2147 = vmatmul.mubr.bf16.gmra.mrb[0].mxu0 %v1913
      %v2148 = vpop.f32.mrb[0].mxu0
      %v2149 = vadd.f32 0.0, %v2148
      %v2150 = vpop.f32.mrb[0].mxu0
      %v2151 = vpop.f32.mrb[0].mxu0
      %v2152 = vadd.f32 0.0, %v2151
      %v2153 = vpop.f32.mrb[0].mxu0
      %2154 = vmatprep.mubr.bf16.mxu0 0
      %2155 = vmatmul.mubr.bf16.gmra.mrb[0].mxu0 %v1916
      %v2156 = vpop.f32.mrb[0].mxu0
      %v2157 = vadd.f32 0.0, %v2156
      %v2158 = vpop.f32.mrb[0].mxu0
      %v2159 = vpop.f32.mrb[0].mxu0
      %v2160 = vadd.f32 0.0, %v2159
      %v2161 = vpop.f32.mrb[0].mxu0
      %2162 = vmatprep.mubr.bf16.mxu0 0
      %2163 = vmatmul.mubr.bf16.gmra.mrb[0].mxu0 %v1919
      %v2164 = vpop.f32.mrb[0].mxu0
      %v2165 = vadd.f32 0.0, %v2164
      %v2166 = vpop.f32.mrb[0].mxu0
      %v2167 = vpop.f32.mrb[0].mxu0
      %v2168 = vadd.f32 0.0, %v2167
      %v2169 = vpop.f32.mrb[0].mxu0
      %2170 = vmatprep.mubr.bf16.mxu0 0
      %2171 = vmatmul.mubr.bf16.gmra.mrb[0].mxu0 %v1922
      %v2172 = vpop.f32.mrb[0].mxu0
      %v2173 = vadd.f32 0.0, %v2172
      %v2174 = vpop.f32.mrb[0].mxu0
      %v2175 = vpop.f32.mrb[0].mxu0
      %v2176 = vadd.f32 0.0, %v2175
      %v2177 = vpop.f32.mrb[0].mxu0
      %2178 = vmatprep.mubr.bf16.mxu0 0
      %2179 = vmatmul.mubr.bf16.gmra.mrb[0].mxu0 %v1925
      %v2180 = vpop.f32.mrb[0].mxu0
      %v2181 = vadd.f32 0.0, %v2180
      %v2182 = vpop.f32.mrb[0].mxu0
      %v2183 = vpop.f32.mrb[0].mxu0
      %v2184 = vadd.f32 0.0, %v2183
      %v2185 = vpop.f32.mrb[0].mxu0
      %2186 = vmatprep.mubr.bf16.mxu0 0
      %2187 = vmatmul.mubr.bf16.gmra.mrb[0].mxu0 %v1928
      %v2188 = vpop.f32.mrb[0].mxu0
      %v2189 = vadd.f32 0.0, %v2188
      %v2190 = vpop.f32.mrb[0].mxu0
      %v2191 = vpop.f32.mrb[0].mxu0
      %v2192 = vadd.f32 0.0, %v2191
      %v2193 = vpop.f32.mrb[0].mxu0
      %2194 = vmatprep.mubr.bf16.mxu0 0
      %2195 = vmatmul.mubr.bf16.gmra.mrb[0].mxu0 %v1931
      %v2196 = vpop.f32.mrb[0].mxu0
      %v2197 = vadd.f32 0.0, %v2196
      %v2198 = vpop.f32.mrb[0].mxu0
      %v2199 = vpop.f32.mrb[0].mxu0
      %v2200 = vadd.f32 0.0, %v2199
      %v2201 = vpop.f32.mrb[0].mxu0
      %2202 = vmatprep.mubr.bf16.mxu0 0
      %2203 = vmatmul.mubr.bf16.gmra.mrb[0].mxu0 %v1934
      %v2204 = vpop.f32.mrb[0].mxu0
      %v2205 = vadd.f32 0.0, %v2204
      %v2206 = vpop.f32.mrb[0].mxu0
      %v2207 = vpop.f32.mrb[0].mxu0
      %v2208 = vadd.f32 0.0, %v2207
      %v2209 = vpop.f32.mrb[0].mxu0
      %2210 = vmatprep.mubr.bf16.mxu0 0
      %2211 = vmatmul.mubr.bf16.gmra.mrb[0].mxu0 %v1937
      %v2212 = vpop.f32.mrb[0].mxu0
      %v2213 = vadd.f32 0.0, %v2212
      %v2214 = vpop.f32.mrb[0].mxu0
      %v2215 = vpop.f32.mrb[0].mxu0
      %v2216 = vadd.f32 0.0, %v2215
      %v2217 = vpop.f32.mrb[0].mxu0
      %2218 = vmatprep.mubr.bf16.mxu0 0
      %2219 = vmatmul.mubr.bf16.gmra.mrb[0].mxu0 %v1940
      %v2220 = vpop.f32.mrb[0].mxu0
      %v2221 = vadd.f32 0.0, %v2220
      %v2222 = vpop.f32.mrb[0].mxu0
      %v2223 = vpop.f32.mrb[0].mxu0
      %v2224 = vadd.f32 0.0, %v2223
      %v2225 = vpop.f32.mrb[0].mxu0
      %2226 = vmatprep.mubr.bf16.mxu0 0
      %2227 = vmatmul.mubr.bf16.gmra.mrb[0].mxu0 %v1943
      %v2228 = vpop.f32.mrb[0].mxu0
      %v2229 = vadd.f32 0.0, %v2228
      %v2230 = vpop.f32.mrb[0].mxu0
      %v2231 = vpop.f32.mrb[0].mxu0
      %v2232 = vadd.f32 0.0, %v2231
      %v2233 = vpop.f32.mrb[0].mxu0
      %2234 = vmatprep.mubr.bf16.mxu0 0
      %2235 = vmatmul.mubr.bf16.gmra.mrb[0].mxu0 %v1946
      %v2236 = vpop.f32.mrb[0].mxu0
      %v2237 = vadd.f32 0.0, %v2236
      %v2238 = vpop.f32.mrb[0].mxu0
      %v2239 = vpop.f32.mrb[0].mxu0
      %v2240 = vadd.f32 0.0, %v2239
      %v2241 = vpop.f32.mrb[0].mxu0
      %2242 = vmatprep.mubr.bf16.mxu0 0
      %2243 = vmatmul.mubr.bf16.gmra.mrb[0].mxu0 %v1949
      %v2244 = vpop.f32.mrb[0].mxu0
      %v2245 = vadd.f32 0.0, %v2244
      %v2246 = vpop.f32.mrb[0].mxu0
      %v2247 = vpop.f32.mrb[0].mxu0
      %v2248 = vadd.f32 0.0, %v2247
      %v2249 = vpop.f32.mrb[0].mxu0
      %2250 = vmatprep.mubr.bf16.mxu0 0
      %2251 = vmatmul.mubr.bf16.gmra.mrb[0].mxu0 %v1952
      %v2252 = vpop.f32.mrb[0].mxu0
      %v2253 = vadd.f32 0.0, %v2252
      %v2254 = vpop.f32.mrb[0].mxu0
      %v2255 = vpop.f32.mrb[0].mxu0
      %v2256 = vadd.f32 0.0, %v2255
      %v2257 = vpop.f32.mrb[0].mxu0
      %2258 = vmatprep.mubr.bf16.mxu0 0
      %2259 = vmatmul.mubr.bf16.gmra.mrb[0].mxu0 %v1955
      %v2260 = vpop.f32.mrb[0].mxu0
      %v2261 = vadd.f32 0.0, %v2260
      %v2262 = vpop.f32.mrb[0].mxu0
      %v2263 = vpop.f32.mrb[0].mxu0
      %v2264 = vadd.f32 0.0, %v2263
      %v2265 = vpop.f32.mrb[0].mxu0
      %2266 = vmatprep.mubr.bf16.mxu0 0
      %2267 = vmatmul.mubr.bf16.gmra.mrb[0].mxu0 %v1958
      %v2268 = vpop.f32.mrb[0].mxu0
      %v2269 = vadd.f32 0.0, %v2268
      %v2270 = vpop.f32.mrb[0].mxu0
      %v2271 = vpop.f32.mrb[0].mxu0
      %v2272 = vadd.f32 0.0, %v2271
      %v2273 = vpop.f32.mrb[0].mxu0
      %2274 = vmatprep.mubr.bf16.mxu0 0
      %2275 = vmatmul.mubr.bf16.gmra.mrb[0].mxu0 %v1961
      %v2276 = vpop.f32.mrb[0].mxu0
      %v2277 = vadd.f32 0.0, %v2276
      %v2278 = vpop.f32.mrb[0].mxu0
      %v2279 = vpop.f32.mrb[0].mxu0
      %v2280 = vadd.f32 0.0, %v2279
      %v2281 = vpop.f32.mrb[0].mxu0
      %2282 = vmatprep.mubr.bf16.mxu0 0
      %2283 = vmatmul.mubr.bf16.gmra.mrb[0].mxu0 %v1964
      %v2284 = vpop.f32.mrb[0].mxu0
      %v2285 = vadd.f32 0.0, %v2284
      %v2286 = vpop.f32.mrb[0].mxu0
      %v2287 = vpop.f32.mrb[0].mxu0
      %v2288 = vadd.f32 0.0, %v2287
      %v2289 = vpop.f32.mrb[0].mxu0
      %2290 = vmatprep.mubr.bf16.mxu0 0
      %2291 = vmatmul.mubr.bf16.gmra.mrb[0].mxu0 %v1967
      %v2292 = vpop.f32.mrb[0].mxu0
      %v2293 = vadd.f32 0.0, %v2292
      %v2294 = vpop.f32.mrb[0].mxu0
      %v2295 = vpop.f32.mrb[0].mxu0
      %v2296 = vadd.f32 0.0, %v2295
      %v2297 = vpop.f32.mrb[0].mxu0
      %2298 = vmatprep.mubr.bf16.mxu0 0
      %2299 = vmatmul.mubr.bf16.gmra.mrb[0].mxu0 %v1970
      %v2300 = vpop.f32.mrb[0].mxu0
      %v2301 = vadd.f32 0.0, %v2300
      %v2302 = vpop.f32.mrb[0].mxu0
      %v2303 = vpop.f32.mrb[0].mxu0
      %v2304 = vadd.f32 0.0, %v2303
      %v2305 = vpop.f32.mrb[0].mxu0
      %2306 = vmatprep.mubr.bf16.mxu0 0
      %2307 = vmatmul.mubr.bf16.gmra.mrb[0].mxu0 %v1973
      %v2308 = vpop.f32.mrb[0].mxu0
      %v2309 = vadd.f32 0.0, %v2308
      %v2310 = vpop.f32.mrb[0].mxu0
      %v2311 = vpop.f32.mrb[0].mxu0
      %v2312 = vadd.f32 0.0, %v2311
      %v2313 = vpop.f32.mrb[0].mxu0
      %2314 = vmatprep.mubr.bf16.mxu0 0
      %2315 = vmatmul.mubr.bf16.gmra.mrb[0].mxu0 %v1976
      %v2316 = vpop.f32.mrb[0].mxu0
      %v2317 = vadd.f32 0.0, %v2316
      %v2318 = vpop.f32.mrb[0].mxu0
      %v2319 = vpop.f32.mrb[0].mxu0
      %v2320 = vadd.f32 0.0, %v2319
      %v2321 = vpop.f32.mrb[0].mxu0
      %2322 = vmatprep.mubr.bf16.mxu0 0
      %2323 = vmatmul.mubr.bf16.gmra.mrb[0].mxu0 %v1979
      %v2324 = vpop.f32.mrb[0].mxu0
      %v2325 = vadd.f32 0.0, %v2324
      %v2326 = vpop.f32.mrb[0].mxu0
      %v2327 = vpop.f32.mrb[0].mxu0
      %v2328 = vadd.f32 0.0, %v2327
      %v2329 = vpop.f32.mrb[0].mxu0
      %2330 = vmatprep.mubr.bf16.mxu0 0
      %2331 = vmatmul.mubr.bf16.gmra.mrb[0].mxu0 %v1982
      %v2332 = vpop.f32.mrb[0].mxu0
      %v2333 = vadd.f32 0.0, %v2332
      %v2334 = vpop.f32.mrb[0].mxu0
      %v2335 = vpop.f32.mrb[0].mxu0
      %v2336 = vadd.f32 0.0, %v2335
      %v2337 = vpop.f32.mrb[0].mxu0
      %2338 = vmatprep.mubr.bf16.mxu0 0
      %2339 = vmatmul.mubr.bf16.gmra.mrb[0].mxu0 %v1985
      %v2340 = vpop.f32.mrb[0].mxu0
      %v2341 = vadd.f32 0.0, %v2340
      %v2342 = vpop.f32.mrb[0].mxu0
      %v2343 = vpop.f32.mrb[0].mxu0
      %v2344 = vadd.f32 0.0, %v2343
      %v2345 = vpop.f32.mrb[0].mxu0
      %2346 = vmatprep.mubr.bf16.mxu0 0
      %2347 = vmatmul.mubr.bf16.gmra.mrb[0].mxu0 %v1988
      %v2348 = vpop.f32.mrb[0].mxu0
      %v2349 = vadd.f32 0.0, %v2348
      %v2350 = vpop.f32.mrb[0].mxu0
      %v2351 = vpop.f32.mrb[0].mxu0
      %v2352 = vadd.f32 0.0, %v2351
      %v2353 = vpop.f32.mrb[0].mxu0
      %2354 = vmatprep.mubr.bf16.mxu0 0
      %2355 = vmatmul.mubr.bf16.gmra.mrb[0].mxu0 %v1991
      %v2356 = vpop.f32.mrb[0].mxu0
      %v2357 = vadd.f32 0.0, %v2356
      %v2358 = vpop.f32.mrb[0].mxu0
      %v2359 = vpop.f32.mrb[0].mxu0
      %v2360 = vadd.f32 0.0, %v2359
      %v2361 = vpop.f32.mrb[0].mxu0
      %2362 = vmatprep.mubr.bf16.mxu0 0
      %2363 = vmatmul.mubr.bf16.gmra.mrb[0].mxu0 %v1994
      %v2364 = vpop.f32.mrb[0].mxu0
      %v2365 = vadd.f32 0.0, %v2364
      %v2366 = vpop.f32.mrb[0].mxu0
      %v2367 = vpop.f32.mrb[0].mxu0
      %v2368 = vadd.f32 0.0, %v2367
      %v2369 = vpop.f32.mrb[0].mxu0
      %2370 = vmatprep.mubr.bf16.mxu0 0
      %2371 = vmatmul.mubr.bf16.gmra.mrb[0].mxu0 %v1997
      %v2372 = vpop.f32.mrb[0].mxu0
      %v2373 = vadd.f32 0.0, %v2372
      %v2374 = vpop.f32.mrb[0].mxu0
      %v2375 = vpop.f32.mrb[0].mxu0
      %v2376 = vadd.f32 0.0, %v2375
      %v2377 = vpop.f32.mrb[0].mxu0
      %2378 = vmatprep.mubr.bf16.mxu0 0
      %2379 = vmatmul.mubr.bf16.gmra.mrb[0].mxu0 %v2000
      %v2380 = vpop.f32.mrb[0].mxu0
      %v2381 = vadd.f32 0.0, %v2380
      %v2382 = vpop.f32.mrb[0].mxu0
      %v2383 = vpop.f32.mrb[0].mxu0
      %v2384 = vadd.f32 0.0, %v2383
      %v2385 = vpop.f32.mrb[0].mxu0
      %2386 = vmatprep.mubr.bf16.mxu0 0
      %2387 = vmatmul.mubr.bf16.gmra.mrb[0].mxu0 %v2003
      %v2388 = vpop.f32.mrb[0].mxu0
      %v2389 = vadd.f32 0.0, %v2388
      %v2390 = vpop.f32.mrb[0].mxu0
      %v2391 = vpop.f32.mrb[0].mxu0
      %v2392 = vadd.f32 0.0, %v2391
      %v2393 = vpop.f32.mrb[0].mxu0
      %2394 = vmatprep.mubr.bf16.mxu0 0
      %2395 = vmatmul.mubr.bf16.gmra.mrb[0].mxu0 %v2006
      %v2396 = vpop.f32.mrb[0].mxu0
      %v2397 = vadd.f32 0.0, %v2396
      %v2398 = vpop.f32.mrb[0].mxu0
      %v2399 = vpop.f32.mrb[0].mxu0
      %v2400 = vadd.f32 0.0, %v2399
      %v2401 = vpop.f32.mrb[0].mxu0
      %2402 = vmatprep.mubr.bf16.mxu0 0
      %2403 = vmatmul.mubr.bf16.gmra.mrb[0].mxu0 %v2009
      %v2404 = vpop.f32.mrb[0].mxu0
      %v2405 = vadd.f32 0.0, %v2404
      %v2406 = vpop.f32.mrb[0].mxu0
      %v2407 = vpop.f32.mrb[0].mxu0
      %v2408 = vadd.f32 0.0, %v2407
      %v2409 = vpop.f32.mrb[0].mxu0
      %2410 = vmatprep.mubr.bf16.mxu0 0
      %2411 = vmatmul.mubr.bf16.gmra.mrb[0].mxu0 %v2012
      %v2412 = vpop.f32.mrb[0].mxu0
      %v2413 = vadd.f32 0.0, %v2412
      %v2414 = vpop.f32.mrb[0].mxu0
      %v2415 = vpop.f32.mrb[0].mxu0
      %v2416 = vadd.f32 0.0, %v2415
      %v2417 = vpop.f32.mrb[0].mxu0
      %2418 = vmatprep.mubr.bf16.mxu0 0
      %2419 = vmatmul.mubr.bf16.gmra.mrb[0].mxu0 %v2015
      %v2420 = vpop.f32.mrb[0].mxu0
      %v2421 = vadd.f32 0.0, %v2420
      %v2422 = vpop.f32.mrb[0].mxu0
      %v2423 = vpop.f32.mrb[0].mxu0
      %v2424 = vadd.f32 0.0, %v2423
      %v2425 = vpop.f32.mrb[0].mxu0
      %2426 = vmatprep.mubr.bf16.mxu0 0
      %2427 = vmatmul.mubr.bf16.gmra.mrb[0].mxu0 %v2018
      %v2428 = vpop.f32.mrb[0].mxu0
      %v2429 = vadd.f32 0.0, %v2428
      %v2430 = vpop.f32.mrb[0].mxu0
      %v2431 = vpop.f32.mrb[0].mxu0
      %v2432 = vadd.f32 0.0, %v2431
      %v2433 = vpop.f32.mrb[0].mxu0
      %2434 = vmatprep.mubr.bf16.mxu0 0
      %2435 = vmatmul.mubr.bf16.gmra.mrb[0].mxu0 %v2021
      %v2436 = vpop.f32.mrb[0].mxu0
      %v2437 = vadd.f32 0.0, %v2436
      %v2438 = vpop.f32.mrb[0].mxu0
      %v2439 = vpop.f32.mrb[0].mxu0
      %v2440 = vadd.f32 0.0, %v2439
      %v2441 = vpop.f32.mrb[0].mxu0
      %2442 = vdwg.mxu0
      %v2443 = vadd.f32 %v1153, %v2061
      %v2444 = vadd.f32 %v1156, %v2064
      %v2445 = vadd.f32 %v1161, %v2069
      %v2446 = vadd.f32 %v1164, %v2072
      %v2447 = vadd.f32 %v1169, %v2077
      %v2448 = vadd.f32 %v1172, %v2080
      %v2449 = vadd.f32 %v1177, %v2085
      %v2450 = vadd.f32 %v1180, %v2088
      %v2451 = vadd.f32 %v1185, %v2093
      %v2452 = vadd.f32 %v1188, %v2096
      %v2453 = vadd.f32 %v1193, %v2101
      %v2454 = vadd.f32 %v1196, %v2104
      %v2455 = vadd.f32 %v1201, %v2109
      %v2456 = vadd.f32 %v1204, %v2112
      %v2457 = vadd.f32 %v1209, %v2117
      %v2458 = vadd.f32 %v1212, %v2120
      %v2459 = vadd.f32 %v1217, %v2125
      %v2460 = vadd.f32 %v1220, %v2128
      %v2461 = vadd.f32 %v1225, %v2133
      %v2462 = vadd.f32 %v1228, %v2136
      %v2463 = vadd.f32 %v1233, %v2141
      %v2464 = vadd.f32 %v1236, %v2144
      %v2465 = vadd.f32 %v1241, %v2149
      %v2466 = vadd.f32 %v1244, %v2152
      %v2467 = vadd.f32 %v1249, %v2157
      %v2468 = vadd.f32 %v1252, %v2160
      %v2469 = vadd.f32 %v1257, %v2165
      %v2470 = vadd.f32 %v1260, %v2168
      %v2471 = vadd.f32 %v1265, %v2173
      %v2472 = vadd.f32 %v1268, %v2176
      %v2473 = vadd.f32 %v1273, %v2181
      %v2474 = vadd.f32 %v1276, %v2184
      %v2475 = vadd.f32 %v1281, %v2189
      %v2476 = vadd.f32 %v1284, %v2192
      %v2477 = vadd.f32 %v1289, %v2197
      %v2478 = vadd.f32 %v1292, %v2200
      %v2479 = vadd.f32 %v1297, %v2205
      %v2480 = vadd.f32 %v1300, %v2208
      %v2481 = vadd.f32 %v1305, %v2213
      %v2482 = vadd.f32 %v1308, %v2216
      %v2483 = vadd.f32 %v1313, %v2221
      %v2484 = vadd.f32 %v1316, %v2224
      %v2485 = vadd.f32 %v1321, %v2229
      %v2486 = vadd.f32 %v1324, %v2232
      %v2487 = vadd.f32 %v1329, %v2237
      %v2488 = vadd.f32 %v1332, %v2240
      %v2489 = vadd.f32 %v1337, %v2245
      %v2490 = vadd.f32 %v1340, %v2248
      %v2491 = vadd.f32 %v1345, %v2253
      %v2492 = vadd.f32 %v1348, %v2256
      %v2493 = vadd.f32 %v1353, %v2261
      %v2494 = vadd.f32 %v1356, %v2264
      %v2495 = vadd.f32 %v1361, %v2269
      %v2496 = vadd.f32 %v1364, %v2272
      %v2497 = vadd.f32 %v1369, %v2277
      %v2498 = vadd.f32 %v1372, %v2280
      %v2499 = vadd.f32 %v1377, %v2285
      %v2500 = vadd.f32 %v1380, %v2288
      %v2501 = vadd.f32 %v1385, %v2293
      %v2502 = vadd.f32 %v1388, %v2296
      %v2503 = vadd.f32 %v1393, %v2301
      %v2504 = vadd.f32 %v1396, %v2304
      %v2505 = vadd.f32 %v1401, %v2309
      %v2506 = vadd.f32 %v1404, %v2312
      %v2507 = vadd.f32 %v1409, %v2317
      %v2508 = vadd.f32 %v1412, %v2320
      %v2509 = vadd.f32 %v1417, %v2325
      %v2510 = vadd.f32 %v1420, %v2328
      %v2511 = vadd.f32 %v1425, %v2333
      %v2512 = vadd.f32 %v1428, %v2336
      %v2513 = vadd.f32 %v1433, %v2341
      %v2514 = vadd.f32 %v1436, %v2344
      %v2515 = vadd.f32 %v1441, %v2349
      %v2516 = vadd.f32 %v1444, %v2352
      %v2517 = vadd.f32 %v1449, %v2357
      %v2518 = vadd.f32 %v1452, %v2360
      %v2519 = vadd.f32 %v1457, %v2365
      %v2520 = vadd.f32 %v1460, %v2368
      %v2521 = vadd.f32 %v1465, %v2373
      %v2522 = vadd.f32 %v1468, %v2376
      %v2523 = vadd.f32 %v1473, %v2381
      %v2524 = vadd.f32 %v1476, %v2384
      %v2525 = vadd.f32 %v1481, %v2389
      %v2526 = vadd.f32 %v1484, %v2392
      %v2527 = vadd.f32 %v1489, %v2397
      %v2528 = vadd.f32 %v1492, %v2400
      %v2529 = vadd.f32 %v1497, %v2405
      %v2530 = vadd.f32 %v1500, %v2408
      %v2531 = vadd.f32 %v1505, %v2413
      %v2532 = vadd.f32 %v1508, %v2416
      %v2533 = vadd.f32 %v1513, %v2421
      %v2534 = vadd.f32 %v1516, %v2424
      %v2535 = vadd.f32 %v1521, %v2429
      %v2536 = vadd.f32 %v1524, %v2432
      %v2537 = vadd.f32 %v1529, %v2437
      %v2538 = vadd.f32 %v1532, %v2440
      %v2539 = vld [vmem:[%s2] sm:$0x1]
      %v2541 = vlaneseq
      %v2542 = vshrl.u32 %v2541, 7
      %v2543 = vsub.s32 0, %v2542
      %v2544 = vrot.slane %v2539, %v2543
      %v2546 = vadd.f32 %v2443, %v2544
      %v2547 = vadd.f32 %v2444, %v2544
      %v2548 = vadd.f32 %v2445, %v2544
      %v2549 = vadd.f32 %v2446, %v2544
      %v2550 = vadd.f32 %v2447, %v2544
      %v2551 = vadd.f32 %v2448, %v2544
      %v2552 = vadd.f32 %v2449, %v2544
      %v2553 = vadd.f32 %v2450, %v2544
      %v2554 = vadd.f32 %v2451, %v2544
      %v2555 = vadd.f32 %v2452, %v2544
      %v2556 = vadd.f32 %v2453, %v2544
      %v2557 = vadd.f32 %v2454, %v2544
      %v2558 = vadd.f32 %v2455, %v2544
      %v2559 = vadd.f32 %v2456, %v2544
      %v2560 = vadd.f32 %v2457, %v2544
      %v2561 = vadd.f32 %v2458, %v2544
      %v2562 = vadd.f32 %v2459, %v2544
      %v2563 = vadd.f32 %v2460, %v2544
      %v2564 = vadd.f32 %v2461, %v2544
      %v2565 = vadd.f32 %v2462, %v2544
      %v2566 = vadd.f32 %v2463, %v2544
      %v2567 = vadd.f32 %v2464, %v2544
      %v2568 = vadd.f32 %v2465, %v2544
      %v2569 = vadd.f32 %v2466, %v2544
      %v2570 = vadd.f32 %v2467, %v2544
      %v2571 = vadd.f32 %v2468, %v2544
      %v2572 = vadd.f32 %v2469, %v2544
      %v2573 = vadd.f32 %v2470, %v2544
      %v2574 = vadd.f32 %v2471, %v2544
      %v2575 = vadd.f32 %v2472, %v2544
      %v2576 = vadd.f32 %v2473, %v2544
      %v2577 = vadd.f32 %v2474, %v2544
      %v2578 = vadd.f32 %v2475, %v2544
      %v2579 = vadd.f32 %v2476, %v2544
      %v2580 = vadd.f32 %v2477, %v2544
      %v2581 = vadd.f32 %v2478, %v2544
      %v2582 = vadd.f32 %v2479, %v2544
      %v2583 = vadd.f32 %v2480, %v2544
      %v2584 = vadd.f32 %v2481, %v2544
      %v2585 = vadd.f32 %v2482, %v2544
      %v2586 = vadd.f32 %v2483, %v2544
      %v2587 = vadd.f32 %v2484, %v2544
      %v2588 = vadd.f32 %v2485, %v2544
      %v2589 = vadd.f32 %v2486, %v2544
      %v2590 = vadd.f32 %v2487, %v2544
      %v2591 = vadd.f32 %v2488, %v2544
      %v2592 = vadd.f32 %v2489, %v2544
      %v2593 = vadd.f32 %v2490, %v2544
      %v2594 = vadd.f32 %v2491, %v2544
      %v2595 = vadd.f32 %v2492, %v2544
      %v2596 = vadd.f32 %v2493, %v2544
      %v2597 = vadd.f32 %v2494, %v2544
      %v2598 = vadd.f32 %v2495, %v2544
      %v2599 = vadd.f32 %v2496, %v2544
      %v2600 = vadd.f32 %v2497, %v2544
      %v2601 = vadd.f32 %v2498, %v2544
      %v2602 = vadd.f32 %v2499, %v2544
      %v2603 = vadd.f32 %v2500, %v2544
      %v2604 = vadd.f32 %v2501, %v2544
      %v2605 = vadd.f32 %v2502, %v2544
      %v2606 = vadd.f32 %v2503, %v2544
      %v2607 = vadd.f32 %v2504, %v2544
      %v2608 = vadd.f32 %v2505, %v2544
      %v2609 = vadd.f32 %v2506, %v2544
      %v2610 = vadd.f32 %v2507, %v2544
      %v2611 = vadd.f32 %v2508, %v2544
      %v2612 = vadd.f32 %v2509, %v2544
      %v2613 = vadd.f32 %v2510, %v2544
      %v2614 = vadd.f32 %v2511, %v2544
      %v2615 = vadd.f32 %v2512, %v2544
      %v2616 = vadd.f32 %v2513, %v2544
      %v2617 = vadd.f32 %v2514, %v2544
      %v2618 = vadd.f32 %v2515, %v2544
      %v2619 = vadd.f32 %v2516, %v2544
      %v2620 = vadd.f32 %v2517, %v2544
      %v2621 = vadd.f32 %v2518, %v2544
      %v2622 = vadd.f32 %v2519, %v2544
      %v2623 = vadd.f32 %v2520, %v2544
      %v2624 = vadd.f32 %v2521, %v2544
      %v2625 = vadd.f32 %v2522, %v2544
      %v2626 = vadd.f32 %v2523, %v2544
      %v2627 = vadd.f32 %v2524, %v2544
      %v2628 = vadd.f32 %v2525, %v2544
      %v2629 = vadd.f32 %v2526, %v2544
      %v2630 = vadd.f32 %v2527, %v2544
      %v2631 = vadd.f32 %v2528, %v2544
      %v2632 = vadd.f32 %v2529, %v2544
      %v2633 = vadd.f32 %v2530, %v2544
      %v2634 = vadd.f32 %v2531, %v2544
      %v2635 = vadd.f32 %v2532, %v2544
      %v2636 = vadd.f32 %v2533, %v2544
      %v2637 = vadd.f32 %v2534, %v2544
      %v2638 = vadd.f32 %v2535, %v2544
      %v2639 = vadd.f32 %v2536, %v2544
      %v2640 = vadd.f32 %v2537, %v2544
      %v2641 = vadd.f32 %v2538, %v2544
      %v2642 = vmax.f32 %v2546, 0.0
      %v2643 = vmax.f32 %v2547, 0.0
      %v2644 = vmax.f32 %v2548, 0.0
      %v2645 = vmax.f32 %v2549, 0.0
      %v2646 = vmax.f32 %v2550, 0.0
      %v2647 = vmax.f32 %v2551, 0.0
      %v2648 = vmax.f32 %v2552, 0.0
      %v2649 = vmax.f32 %v2553, 0.0
      %v2650 = vmax.f32 %v2554, 0.0
      %v2651 = vmax.f32 %v2555, 0.0
      %v2652 = vmax.f32 %v2556, 0.0
      %v2653 = vmax.f32 %v2557, 0.0
      %v2654 = vmax.f32 %v2558, 0.0
      %v2655 = vmax.f32 %v2559, 0.0
      %v2656 = vmax.f32 %v2560, 0.0
      %v2657 = vmax.f32 %v2561, 0.0
      %v2658 = vmax.f32 %v2562, 0.0
      %v2659 = vmax.f32 %v2563, 0.0
      %v2660 = vmax.f32 %v2564, 0.0
      %v2661 = vmax.f32 %v2565, 0.0
      %v2662 = vmax.f32 %v2566, 0.0
      %v2663 = vmax.f32 %v2567, 0.0
      %v2664 = vmax.f32 %v2568, 0.0
      %v2665 = vmax.f32 %v2569, 0.0
      %v2666 = vmax.f32 %v2570, 0.0
      %v2667 = vmax.f32 %v2571, 0.0
      %v2668 = vmax.f32 %v2572, 0.0
      %v2669 = vmax.f32 %v2573, 0.0
      %v2670 = vmax.f32 %v2574, 0.0
      %v2671 = vmax.f32 %v2575, 0.0
      %v2672 = vmax.f32 %v2576, 0.0
      %v2673 = vmax.f32 %v2577, 0.0
      %v2674 = vmax.f32 %v2578, 0.0
      %v2675 = vmax.f32 %v2579, 0.0
      %v2676 = vmax.f32 %v2580, 0.0
      %v2677 = vmax.f32 %v2581, 0.0
      %v2678 = vmax.f32 %v2582, 0.0
      %v2679 = vmax.f32 %v2583, 0.0
      %v2680 = vmax.f32 %v2584, 0.0
      %v2681 = vmax.f32 %v2585, 0.0
      %v2682 = vmax.f32 %v2586, 0.0
      %v2683 = vmax.f32 %v2587, 0.0
      %v2684 = vmax.f32 %v2588, 0.0
      %v2685 = vmax.f32 %v2589, 0.0
      %v2686 = vmax.f32 %v2590, 0.0
      %v2687 = vmax.f32 %v2591, 0.0
      %v2688 = vmax.f32 %v2592, 0.0
      %v2689 = vmax.f32 %v2593, 0.0
      %v2690 = vmax.f32 %v2594, 0.0
      %v2691 = vmax.f32 %v2595, 0.0
      %v2692 = vmax.f32 %v2596, 0.0
      %v2693 = vmax.f32 %v2597, 0.0
      %v2694 = vmax.f32 %v2598, 0.0
      %v2695 = vmax.f32 %v2599, 0.0
      %v2696 = vmax.f32 %v2600, 0.0
      %v2697 = vmax.f32 %v2601, 0.0
      %v2698 = vmax.f32 %v2602, 0.0
      %v2699 = vmax.f32 %v2603, 0.0
      %v2700 = vmax.f32 %v2604, 0.0
      %v2701 = vmax.f32 %v2605, 0.0
      %v2702 = vmax.f32 %v2606, 0.0
      %v2703 = vmax.f32 %v2607, 0.0
      %v2704 = vmax.f32 %v2608, 0.0
      %v2705 = vmax.f32 %v2609, 0.0
      %v2706 = vmax.f32 %v2610, 0.0
      %v2707 = vmax.f32 %v2611, 0.0
      %v2708 = vmax.f32 %v2612, 0.0
      %v2709 = vmax.f32 %v2613, 0.0
      %v2710 = vmax.f32 %v2614, 0.0
      %v2711 = vmax.f32 %v2615, 0.0
      %v2712 = vmax.f32 %v2616, 0.0
      %v2713 = vmax.f32 %v2617, 0.0
      %v2714 = vmax.f32 %v2618, 0.0
      %v2715 = vmax.f32 %v2619, 0.0
      %v2716 = vmax.f32 %v2620, 0.0
      %v2717 = vmax.f32 %v2621, 0.0
      %v2718 = vmax.f32 %v2622, 0.0
      %v2719 = vmax.f32 %v2623, 0.0
      %v2720 = vmax.f32 %v2624, 0.0
      %v2721 = vmax.f32 %v2625, 0.0
      %v2722 = vmax.f32 %v2626, 0.0
      %v2723 = vmax.f32 %v2627, 0.0
      %v2724 = vmax.f32 %v2628, 0.0
      %v2725 = vmax.f32 %v2629, 0.0
      %v2726 = vmax.f32 %v2630, 0.0
      %v2727 = vmax.f32 %v2631, 0.0
      %v2728 = vmax.f32 %v2632, 0.0
      %v2729 = vmax.f32 %v2633, 0.0
      %v2730 = vmax.f32 %v2634, 0.0
      %v2731 = vmax.f32 %v2635, 0.0
      %v2732 = vmax.f32 %v2636, 0.0
      %v2733 = vmax.f32 %v2637, 0.0
      %v2734 = vmax.f32 %v2638, 0.0
      %v2735 = vmax.f32 %v2639, 0.0
      %v2736 = vmax.f32 %v2640, 0.0
      %v2737 = vmax.f32 %v2641, 0.0
      %v2738 = vadd.f32 %v2642, %v2643
      %v2739 = vadd.f32 %v2738, %v2644
      %v2740 = vadd.f32 %v2739, %v2645
      %v2741 = vadd.f32 %v2740, %v2646
      %v2742 = vadd.f32 %v2741, %v2647
      %v2743 = vadd.f32 %v2742, %v2648
      %v2744 = vadd.f32 %v2743, %v2649
      %v2745 = vadd.f32 %v2744, %v2650
      %v2746 = vadd.f32 %v2745, %v2651
      %v2747 = vadd.f32 %v2746, %v2652
      %v2748 = vadd.f32 %v2747, %v2653
      %v2749 = vadd.f32 %v2748, %v2654
      %v2750 = vadd.f32 %v2749, %v2655
      %v2751 = vadd.f32 %v2750, %v2656
      %v2752 = vadd.f32 %v2751, %v2657
      %v2753 = vadd.f32 %v2752, %v2658
      %v2754 = vadd.f32 %v2753, %v2659
      %v2755 = vadd.f32 %v2754, %v2660
      %v2756 = vadd.f32 %v2755, %v2661
      %v2757 = vadd.f32 %v2756, %v2662
      %v2758 = vadd.f32 %v2757, %v2663
      %v2759 = vadd.f32 %v2758, %v2664
      %v2760 = vadd.f32 %v2759, %v2665
      %v2761 = vadd.f32 %v2760, %v2666
      %v2762 = vadd.f32 %v2761, %v2667
      %v2763 = vadd.f32 %v2762, %v2668
      %v2764 = vadd.f32 %v2763, %v2669
      %v2765 = vadd.f32 %v2764, %v2670
      %v2766 = vadd.f32 %v2765, %v2671
      %v2767 = vadd.f32 %v2766, %v2672
      %v2768 = vadd.f32 %v2767, %v2673
      %v2769 = vadd.f32 %v2768, %v2674
      %v2770 = vadd.f32 %v2769, %v2675
      %v2771 = vadd.f32 %v2770, %v2676
      %v2772 = vadd.f32 %v2771, %v2677
      %v2773 = vadd.f32 %v2772, %v2678
      %v2774 = vadd.f32 %v2773, %v2679
      %v2775 = vadd.f32 %v2774, %v2680
      %v2776 = vadd.f32 %v2775, %v2681
      %v2777 = vadd.f32 %v2776, %v2682
      %v2778 = vadd.f32 %v2777, %v2683
      %v2779 = vadd.f32 %v2778, %v2684
      %v2780 = vadd.f32 %v2779, %v2685
      %v2781 = vadd.f32 %v2780, %v2686
      %v2782 = vadd.f32 %v2781, %v2687
      %v2783 = vadd.f32 %v2782, %v2688
      %v2784 = vadd.f32 %v2783, %v2689
      %v2785 = vadd.f32 %v2784, %v2690
      %v2786 = vadd.f32 %v2785, %v2691
      %v2787 = vadd.f32 %v2786, %v2692
      %v2788 = vadd.f32 %v2787, %v2693
      %v2789 = vadd.f32 %v2788, %v2694
      %v2790 = vadd.f32 %v2789, %v2695
      %v2791 = vadd.f32 %v2790, %v2696
      %v2792 = vadd.f32 %v2791, %v2697
      %v2793 = vadd.f32 %v2792, %v2698
      %v2794 = vadd.f32 %v2793, %v2699
      %v2795 = vadd.f32 %v2794, %v2700
      %v2796 = vadd.f32 %v2795, %v2701
      %v2797 = vadd.f32 %v2796, %v2702
      %v2798 = vadd.f32 %v2797, %v2703
      %v2799 = vadd.f32 %v2798, %v2704
      %v2800 = vadd.f32 %v2799, %v2705
      %v2801 = vadd.f32 %v2800, %v2706
      %v2802 = vadd.f32 %v2801, %v2707
      %v2803 = vadd.f32 %v2802, %v2708
      %v2804 = vadd.f32 %v2803, %v2709
      %v2805 = vadd.f32 %v2804, %v2710
      %v2806 = vadd.f32 %v2805, %v2711
      %v2807 = vadd.f32 %v2806, %v2712
      %v2808 = vadd.f32 %v2807, %v2713
      %v2809 = vadd.f32 %v2808, %v2714
      %v2810 = vadd.f32 %v2809, %v2715
      %v2811 = vadd.f32 %v2810, %v2716
      %v2812 = vadd.f32 %v2811, %v2717
      %v2813 = vadd.f32 %v2812, %v2718
      %v2814 = vadd.f32 %v2813, %v2719
      %v2815 = vadd.f32 %v2814, %v2720
      %v2816 = vadd.f32 %v2815, %v2721
      %v2817 = vadd.f32 %v2816, %v2722
      %v2818 = vadd.f32 %v2817, %v2723
      %v2819 = vadd.f32 %v2818, %v2724
      %v2820 = vadd.f32 %v2819, %v2725
      %v2821 = vadd.f32 %v2820, %v2726
      %v2822 = vadd.f32 %v2821, %v2727
      %v2823 = vadd.f32 %v2822, %v2728
      %v2824 = vadd.f32 %v2823, %v2729
      %v2825 = vadd.f32 %v2824, %v2730
      %v2826 = vadd.f32 %v2825, %v2731
      %v2827 = vadd.f32 %v2826, %v2732
      %v2828 = vadd.f32 %v2827, %v2733
      %v2829 = vadd.f32 %v2828, %v2734
      %v2830 = vadd.f32 %v2829, %v2735
      %v2831 = vadd.f32 %v2830, %v2736
      %v2832 = vadd.f32 %v2831, %v2737
      %v2833 = vrot.slane %v2832, 4
      %v2834 = vadd.f32 %v2832, %v2833
      %v2835 = vrot.slane %v2834, 2
      %v2836 = vadd.f32 %v2834, %v2835
      %v2837 = vrot.slane %v2836, 1
      %v2838 = vadd.f32 %v2836, %v2837
      %v2839 = vmul.f32 %v2838, 0.0013020834
      %2840 = vst [vmem:[%s166] sm:$0x1] %v2839
      %p2841 = scmp.lt.s32.totalorder %s14, 5
      %s2842 = scalar_select %p2841, %s14, 5
      %s2843 = scalar_lea.vmem %s3, %s2842
      // Predicated region
      $region33: #{meta_template_parse_feature.1} parent=31 // pred_check
        %p2844 = pneg %p100
      $region34: #{meta_template_parse_feature.1} parent=31 // pred_check_branch
        %2846 = sbr.rel (%p2844) target = $region36
      $region35: #{meta_template_parse_feature.1} parent=31 // pred_region
        _
      $region36: #{meta_template_parse_feature.1} parent=31 // pred_fallthru
        _
    $region32: #{meta_template_parse_feature.1} parent=5 // pred_fallthru
      _
    %p2847 = scmp.le.s32.totalorder 2, %s9
    // Predicated region
    $region37: #{meta_template_parse_feature.1} parent=5 // pred_check
      %p2848 = pneg %p2847
    $region38: #{meta_template_parse_feature.1} parent=5 // pred_check_branch
      %2850 = sbr.rel (%p2848) target = $region40
    $region39: #{meta_template_parse_feature.1} parent=5 // pred_region
      %s2851 = ssub.s32 %s9, 2
      // Predicated region
      $region41: #{meta_template_parse_feature.1} parent=39 // pred_check
        %p2852 = pneg %p106
      $region42: #{meta_template_parse_feature.1} parent=39 // pred_check_branch
        %2854 = sbr.rel (%p2852) target = $region44
      $region43: #{meta_template_parse_feature.1} parent=39 // pred_region
        %p2855 = scmp.lt.s32.totalorder %s15, 5
        %s2856 = scalar_select %p2855, %s15, 5
        %s2857 = scalar_lea.vmem %s3, %s2856
      $region44: #{meta_template_parse_feature.1} parent=39 // pred_fallthru
        _
    $region40: #{meta_template_parse_feature.1} parent=5 // pred_fallthru
      _
  $region6: #{meta_template_parse_feature.1} parent=0 // loop_footer
    %s13 = sadd.s32 1, %s9
  $region7: #{meta_template_parse_feature.1} parent=0 // loop_footer_branch
    %8 = sbr.rel target = $region3
  $region8: #{meta_template_parse_feature.1} parent=0 // loop_exit
    _

// kernel: squeeze.1
$region0: #{squeeze.1}
  %s0 = inlined_call_operand.vmem [shape: f32[6,32], index: 0, kind: input, shape index: {}]
  %s1 = inlined_call_operand.vmem [shape: f32[2,3,32], index: 1, kind: output, shape index: {}]
  $region1: #{squeeze.1} parent=0
    #allocation0 [shape = 'u8[8192]{0}', space=vmem, size = 0x2000, scoped, tag = 'scoped mem for output reshape']
    %v2 = vld [vmem:[%s0] sm:$0x3f]
    %vm3 = vcmask 261120
    %4 = vst.msk [vmem:[#allocation0] sm:$0x7] %vm3, %v2
    %s5 = scalar_lea.vmem [#allocation0], 5
    %6 = vst.msk [vmem:[%s5] sm:$0x38] %vm3, %v2
    %s8 = sshllo.u32 0, 4
    %v10 = vld [vmem:[#allocation0] sm:%s8]
    %s11 = sshllo.u32 0, 4
    %12 = vst [vmem:[%s1] sm:%s11] %v10
    %s13 = scalar_lea.vmem [#allocation0], 8
    %v14 = vld [vmem:[%s13] sm:%s8]
    %s15 = sshllo.u32 0, 4
    %s16 = scalar_lea.vmem %s1, 4
    %17 = vst [vmem:[%s16] sm:%s15] %v14

</llo_original>
